<compile_context>
chip_gen: v7x
topology: tpu7x:2x2x1
jax: 0.10.0
libtpu: 0.0.40
codegen_flags: <defaults>
</compile_context>

<pallas_src>
import jax
import jax.numpy as jnp
from jax.experimental import pallas as pl
from jax.experimental.pallas import tpu as pltpu


def _round_up(x, m):
    return ((x + m - 1) // m) * m


def _pick_batch_tiling(B):
    """Pad B to a tile-able size and choose the recurrence batch tile."""
    B_pad = _round_up(max(B, 8), 8)
    try:
        kind = jax.devices()[0].device_kind.lower()
    except Exception:  # pragma: no cover
        kind = ""
    two_tc = "v7" in kind  # v7x: 2 TensorCores per chip
    if B_pad > 128:
        # Cap rows per tile at 128 (vreg-file / VMEM sanity); grid over batch.
        B_pad = _round_up(B_pad, 128)
        return B_pad, 128
    if two_tc and B_pad >= 16:
        B_pad = _round_up(B_pad, 16)
        return B_pad, B_pad // 2  # one batch tile per TensorCore
    return B_pad, B_pad  # single TC: any batch tiling is pure overhead


def _pick_t_chunk(T, b_tile, h_pad, budget_bytes=8 << 20):
    """Time-chunk length so (x chunk + gx scratch) stays within ~budget."""
    per_step_bytes = b_tile * h_pad * 4 * (1 + 4)  # x row + 4-gate gx row, f32
    tc = max(8, budget_bytes // per_step_bytes)
    return int(min(T, tc))


def _make_encoder_lstm_kernel(seq_len, t_chunk):
    """Fused (input-projection + LSTM recurrence) kernel for one grid step."""
    has_tail = (seq_len % t_chunk) != 0

    def kernel(x_ref, wih_ref, whh_ref, bias_ref, h_out_ref, c_out_ref,
               gx_sc, h_sc, c_sc):
        t = pl.program_id(1)
        Tc, Bt, Hp = x_ref.shape  # (T_CHUNK, B_TILE, H_pad)

        # ---- fused Stage 1: input projection for the whole time chunk ------
        # One fat MXU matmul with M = Tc*Bt; result parked in VMEM scratch.
        x = x_ref[...].reshape(Tc * Bt, Hp)
        gx = jnp.dot(x, wih_ref[...], preferred_element_type=jnp.float32)
        gx_sc[...] = gx + bias_ref[...]  # (Tc*Bt, 4*Hp)

        # ---- carry init at the first time chunk of this batch tile ---------
        @pl.when(t == 0)
        def _():
            h_sc[...] = jnp.zeros_like(h_sc)
            c_sc[...] = jnp.zeros_like(c_sc)

        # ---- Stage 2: serial recurrence over the chunk ----------------------
        def step(tt, carry):
            h, c = carry
            row0 = pl.multiple_of(tt * Bt, Bt)  # Bt is a multiple of 8
            gates = gx_sc[pl.ds(row0, Bt), :] + jnp.dot(
                h, whh_ref[...], preferred_element_type=jnp.float32)
            i_g = jax.nn.sigmoid(gates[:, 0 * Hp:1 * Hp])
            f_g = jax.nn.sigmoid(gates[:, 1 * Hp:2 * Hp])
            g_g = jnp.tanh(gates[:, 2 * Hp:3 * Hp])
            o_g = jax.nn.sigmoid(gates[:, 3 * Hp:4 * Hp])
            c_new = f_g * c + i_g * g_g
            h_new = o_g * jnp.tanh(c_new)
            if has_tail:  # mask padded trailing timesteps (static branch)
                valid = (t * Tc + tt) < seq_len
                h_new = jnp.where(valid, h_new, h)
                c_new = jnp.where(valid, c_new, c)
            return h_new, c_new

        h_fin, c_fin = jax.lax.fori_loop(
            0, Tc, step, (h_sc[...], c_sc[...]), unroll=min(Tc, 8))
        h_sc[...] = h_fin
        c_sc[...] = c_fin

        # ---- write h_n / c_n only after the last time chunk -----------------
        @pl.when(t == pl.num_programs(1) - 1)
        def _():
            h_out_ref[...] = h_fin
            c_out_ref[...] = c_fin

    return kernel


def encoder_forward(tokens, emb_table, w_ih, w_hh, b_ih, b_hh, *, t_chunk=None):
    """
    tokens:     (B, T) int32
    emb_table:  (V, H) float32
    w_ih, w_hh: (4H, H) float32 (PyTorch layout, gate order i, f, g, o)
    b_ih, b_hh: (4H,)  float32
    returns (h_n, c_n), each (1, B, H) -- same as PyTorch nn.LSTM hidden output.
    """
    B, T = tokens.shape
    H = emb_table.shape[1]
    H_pad = _round_up(max(H, 128), 128)

    B_pad, B_TILE = _pick_batch_tiling(B)
    n_b = B_pad // B_TILE

    T_CHUNK = int(t_chunk) if t_chunk is not None else _pick_t_chunk(T, B_TILE, H_pad)
    T_CHUNK = max(1, min(T_CHUNK, T))
    T_pad = _round_up(T, T_CHUNK)
    n_t = T_pad // T_CHUNK

    # ---- per-gate zero padding of weights / bias ---------------------------
    def pad_w(w):  # (4H, H) -> (4*H_pad, H_pad)
        w4 = w.reshape(4, H, H)
        w4 = jnp.pad(w4, ((0, 0), (0, H_pad - H), (0, H_pad - H)))
        return w4.reshape(4 * H_pad, H_pad)

    def pad_b(b):  # (4H,) -> (4*H_pad,)
        b4 = b.reshape(4, H)
        b4 = jnp.pad(b4, ((0, 0), (0, H_pad - H)))
        return b4.reshape(4 * H_pad)

    wih_t = pad_w(w_ih).T                                    # (H_pad, 4*H_pad)
    whh_t = pad_w(w_hh).T                                    # (H_pad, 4*H_pad)
    bias = (pad_b(b_ih) + pad_b(b_hh)).reshape(1, 4 * H_pad)

    # ---- glue: embedding gather, directly in padded time-major layout ------
    # Pad the *tokens* (tiny ints) and the table (V x H_pad), so the gather
    # itself emits (T_pad, B_pad, H_pad) -- no big-tensor pad/transpose copies.
    emb_p = jnp.pad(emb_table, ((0, 0), (0, H_pad - H)))
    tok_p = jnp.pad(tokens, ((0, B_pad - B), (0, T_pad - T)))
    x = jnp.take(emb_p, tok_p.T, axis=0)                     # (T_pad, B_pad, H_pad)

    # ---- VMEM budgeting -----------------------------------------------------
    f32b = 4
    blk_x = T_CHUNK * B_TILE * H_pad * f32b
    blk_w = H_pad * 4 * H_pad * f32b
    blk_bias = 4 * H_pad * f32b
    blk_out = B_TILE * H_pad * f32b
    scratch_bytes = T_CHUNK * B_TILE * 4 * H_pad * f32b + 2 * B_TILE * H_pad * f32b
    footprint = (2 * blk_x + 2 * (2 * blk_w) + 2 * blk_bias
                 + 2 * (2 * blk_out) + scratch_bytes)
    vmem_limit = int(min(max(2 * footprint, 32 << 20), 64 << 20))

    kernel = _make_encoder_lstm_kernel(seq_len=T, t_chunk=T_CHUNK)

    h_p, c_p = pl.pallas_call(
        kernel,
        out_shape=(
            jax.ShapeDtypeStruct((B_pad, H_pad), jnp.float32),
            jax.ShapeDtypeStruct((B_pad, H_pad), jnp.float32),
        ),
        grid_spec=pltpu.PrefetchScalarGridSpec(
            num_scalar_prefetch=0,
            grid=(n_b, n_t),
            in_specs=[
                # x time-chunk: pipelined over the "arbitrary" t axis
                pl.BlockSpec((T_CHUNK, B_TILE, H_pad), lambda b, t: (t, b, 0)),
                # grid-constant weights / bias
                pl.BlockSpec((H_pad, 4 * H_pad), lambda b, t: (0, 0)),   # W_ih^T
                pl.BlockSpec((H_pad, 4 * H_pad), lambda b, t: (0, 0)),   # W_hh^T
                pl.BlockSpec((1, 4 * H_pad), lambda b, t: (0, 0)),       # bias
            ],
            out_specs=[
                pl.BlockSpec((B_TILE, H_pad), lambda b, t: (b, 0)),      # h_n
                pl.BlockSpec((B_TILE, H_pad), lambda b, t: (b, 0)),      # c_n
            ],
            scratch_shapes=[
                pltpu.VMEM((T_CHUNK * B_TILE, 4 * H_pad), jnp.float32),  # gx chunk
                pltpu.VMEM((B_TILE, H_pad), jnp.float32),                # h carry
                pltpu.VMEM((B_TILE, H_pad), jnp.float32),                # c carry
            ],
        ),
        compiler_params=pltpu.CompilerParams(
            dimension_semantics=("parallel", "arbitrary"),
            vmem_limit_bytes=vmem_limit,
        ),
    )(x, wih_t, whh_t, bias)

    h_n = h_p[:B, :H][None]                                   # (1, B, H)
    c_n = c_p[:B, :H][None]                                   # (1, B, H)
    return h_n, c_n


# ---------------------------------------------------------------------------
# Pure-JAX reference of the PyTorch Encoder forward
# ---------------------------------------------------------------------------
def encoder_reference(tokens, emb_table, w_ih, w_hh, b_ih, b_hh):
    B, T = tokens.shape
    H = emb_table.shape[1]
    x = jnp.take(emb_table, tokens, axis=0)  # (B, T, H)
    h = jnp.zeros((B, H), jnp.float32)
    c = jnp.zeros((B, H), jnp.float32)
    for t in range(T):
        gates = x[:, t, :] @ w_ih.T + h @ w_hh.T + b_ih + b_hh
        i_g = jax.nn.sigmoid(gates[:, 0 * H:1 * H])
        f_g = jax.nn.sigmoid(gates[:, 1 * H:2 * H])
        g_g = jnp.tanh(gates[:, 2 * H:3 * H])
        o_g = jax.nn.sigmoid(gates[:, 3 * H:4 * H])
        c = f_g * c + i_g * g_g
        h = o_g * jnp.tanh(c)
    return h[None], c[None]


if __name__ == "__main__":
    V, H = 16, 32
    key = jax.random.PRNGKey(0)
    k_emb, k_wih, k_whh, k_bih, k_bhh, k_tok1, k_tok2 = jax.random.split(key, 7)

    stdv = 1.0 / jnp.sqrt(H)
    emb_table = jax.random.normal(k_emb, (V, H), jnp.float32)
    w_ih = jax.random.uniform(k_wih, (4 * H, H), jnp.float32, -stdv, stdv)
    w_hh = jax.random.uniform(k_whh, (4 * H, H), jnp.float32, -stdv, stdv)
    b_ih = jax.random.uniform(k_bih, (4 * H,), jnp.float32, -stdv, stdv)
    b_hh = jax.random.uniform(k_bhh, (4 * H,), jnp.float32, -stdv, stdv)

    # Case 1: nominal small shapes (single time chunk).
    B1, T1 = 2, 8
    tok1 = jax.random.randint(k_tok1, (B1, T1), 0, V, jnp.int32)
    h1, c1 = encoder_forward(tok1, emb_table, w_ih, w_hh, b_ih, b_hh)
    jax.block_until_ready((h1, c1))
    h1r, c1r = encoder_reference(tok1, emb_table, w_ih, w_hh, b_ih, b_hh)
    assert h1.shape == (1, B1, H) and c1.shape == (1, B1, H)
    assert jnp.allclose(h1, h1r, atol=1e-5, rtol=1e-5)
    assert jnp.allclose(c1, c1r, atol=1e-5, rtol=1e-5)

    # Case 2: force multiple time chunks + a ragged tail (chunked carry path).
    B2, T2 = 3, 11
    tok2 = jax.random.randint(k_tok2, (B2, T2), 0, V, jnp.int32)
    h2, c2 = encoder_forward(tok2, emb_table, w_ih, w_hh, b_ih, b_hh, t_chunk=4)
    jax.block_until_ready((h2, c2))
    h2r, c2r = encoder_reference(tok2, emb_table, w_ih, w_hh, b_ih, b_hh)
    assert h2.shape == (1, B2, H) and c2.shape == (1, B2, H)
    assert jnp.allclose(h2, h2r, atol=1e-5, rtol=1e-5)
    assert jnp.allclose(c2, c2r, atol=1e-5, rtol=1e-5)

    print("KERNEL_OK")
</pallas_src>

<mosaic_0001>
module attributes {stable_mosaic.version = 11 : i64} {
  func.func @kernel(%arg0: i32, %arg1: i32, %arg2: memref<8x8x128xf32, #tpu.memory_space<vmem>>, %arg3: memref<128x512xf32, #tpu.memory_space<vmem>>, %arg4: memref<128x512xf32, #tpu.memory_space<vmem>>, %arg5: memref<1x512xf32, #tpu.memory_space<vmem>>, %arg6: memref<8x128xf32, #tpu.memory_space<vmem>>, %arg7: memref<8x128xf32, #tpu.memory_space<vmem>>, %arg8: memref<64x512xf32, #tpu.memory_space<vmem>>, %arg9: memref<8x128xf32, #tpu.memory_space<vmem>>, %arg10: memref<8x128xf32, #tpu.memory_space<vmem>>) attributes {dimension_semantics = [#tpu.dimension_semantics<parallel>, #tpu.dimension_semantics<arbitrary>], iteration_bounds = array<i64: 1, 1>, scalar_prefetch = 0 : i64, scratch_operands = 3 : i64, tpu.core_type = #tpu.core_type<tc>, window_params = [{transform_indices = @transform_0, window_bounds = array<i64: 8, 8, 128>}, {pipeline_mode = #tpu.pipeline_mode<synchronous>, transform_indices = @transform_1, window_bounds = array<i64: 128, 512>}, {pipeline_mode = #tpu.pipeline_mode<synchronous>, transform_indices = @transform_2, window_bounds = array<i64: 128, 512>}, {pipeline_mode = #tpu.pipeline_mode<synchronous>, transform_indices = @transform_3, window_bounds = array<i64: 1, 512>}, {transform_indices = @transform_4, window_bounds = array<i64: 8, 128>}, {transform_indices = @transform_5, window_bounds = array<i64: 8, 128>}]} {
    %c0 = arith.constant 0 : index
    %c0_0 = arith.constant 0 : index
    %c0_1 = arith.constant 0 : index
    %0 = vector.load %arg2[%c0, %c0_0, %c0_1] : memref<8x8x128xf32, #tpu.memory_space<vmem>>, vector<8x8x128xf32>
    %1 = vector.shape_cast %0 : vector<8x8x128xf32> to vector<64x128xf32>
    %c0_2 = arith.constant 0 : index
    %c0_3 = arith.constant 0 : index
    %2 = vector.load %arg3[%c0_2, %c0_3] : memref<128x512xf32, #tpu.memory_space<vmem>>, vector<128x512xf32>
    %cst = arith.constant dense<0.000000e+00> : vector<64x512xf32>
    %3 = tpu.matmul %1, %2, %cst {dimension_numbers = #tpu.dot_dimension_numbers<[1], [0], [0], [1], [0, 0, 1, 1], [], []>} : vector<64x128xf32>, vector<128x512xf32>, vector<64x512xf32> -> vector<64x512xf32>
    %c0_4 = arith.constant 0 : index
    %c0_5 = arith.constant 0 : index
    %4 = vector.load %arg5[%c0_4, %c0_5] : memref<1x512xf32, #tpu.memory_space<vmem>>, vector<1x512xf32>
    %5 = vector.broadcast %4 : vector<1x512xf32> to vector<64x512xf32>
    %6 = arith.addf %3, %5 : vector<64x512xf32>
    %c0_6 = arith.constant 0 : index
    %c0_7 = arith.constant 0 : index
    %7 = vector.load %arg8[%c0_6, %c0_7] : memref<64x512xf32, #tpu.memory_space<vmem>>, vector<64x512xf32>
    tpu.vector_store %arg8[%c0_6, %c0_7], %6 {strides = array<i32>} : memref<64x512xf32, #tpu.memory_space<vmem>>, vector<64x512xf32>,
    %c0_i32 = arith.constant 0 : i32
    %8 = arith.cmpi eq, %arg1, %c0_i32 : i32
    %9 = arith.extui %8 : i1 to i32
    %c0_i32_8 = arith.constant 0 : i32
    %10 = arith.cmpi ne, %9, %c0_i32_8 : i32
    scf.if %10 {
      %cst_84 = arith.constant 0.000000e+00 : f32
      %274 = vector.broadcast %cst_84 : f32 to vector<8x128xf32>
      %c0_85 = arith.constant 0 : index
      %c0_86 = arith.constant 0 : index
      %275 = vector.load %arg9[%c0_85, %c0_86] : memref<8x128xf32, #tpu.memory_space<vmem>>, vector<8x128xf32>
      tpu.vector_store %arg9[%c0_85, %c0_86], %274 {strides = array<i32>} : memref<8x128xf32, #tpu.memory_space<vmem>>, vector<8x128xf32>,
      %cst_87 = arith.constant 0.000000e+00 : f32
      %276 = vector.broadcast %cst_87 : f32 to vector<8x128xf32>
      %c0_88 = arith.constant 0 : index
      %c0_89 = arith.constant 0 : index
      %277 = vector.load %arg10[%c0_88, %c0_89] : memref<8x128xf32, #tpu.memory_space<vmem>>, vector<8x128xf32>
      tpu.vector_store %arg10[%c0_88, %c0_89], %276 {strides = array<i32>} : memref<8x128xf32, #tpu.memory_space<vmem>>, vector<8x128xf32>,
    } else {
    }
    %c0_9 = arith.constant 0 : index
    %c0_10 = arith.constant 0 : index
    %11 = vector.load %arg9[%c0_9, %c0_10] : memref<8x128xf32, #tpu.memory_space<vmem>>, vector<8x128xf32>
    %c0_11 = arith.constant 0 : index
    %c0_12 = arith.constant 0 : index
    %12 = vector.load %arg10[%c0_11, %c0_12] : memref<8x128xf32, #tpu.memory_space<vmem>>, vector<8x128xf32>
    %c0_i32_13 = arith.constant 0 : i32
    %c8_i32 = arith.constant 8 : i32
    %13 = arith.muli %c0_i32_13, %c8_i32 : i32
    %14 = tpu.assume_multiple %13, 8 : i32
    %15 = arith.index_cast %14 : i32 to index
    %c0_14 = arith.constant 0 : index
    %16 = vector.load %arg8[%15, %c0_14] : memref<64x512xf32, #tpu.memory_space<vmem>>, vector<8x512xf32>
    %c0_15 = arith.constant 0 : index
    %c0_16 = arith.constant 0 : index
    %17 = vector.load %arg4[%c0_15, %c0_16] : memref<128x512xf32, #tpu.memory_space<vmem>>, vector<128x512xf32>
    %cst_17 = arith.constant dense<0.000000e+00> : vector<8x512xf32>
    %18 = tpu.matmul %11, %17, %cst_17 {dimension_numbers = #tpu.dot_dimension_numbers<[1], [0], [0], [1], [0, 0, 1, 1], [], []>} : vector<8x128xf32>, vector<128x512xf32>, vector<8x512xf32> -> vector<8x512xf32>
    %19 = arith.addf %16, %18 : vector<8x512xf32>
    %20 = vector.extract_strided_slice %19 {offsets = [0, 0], sizes = [8, 128], strides = [1, 1]} : vector<8x512xf32> to vector<8x128xf32>
    %21 = arith.negf %20 : vector<8x128xf32>
    %22 = math.exp %21 : vector<8x128xf32>
    %cst_18 = arith.constant 1.000000e+00 : f32
    %23 = vector.broadcast %cst_18 : f32 to vector<8x128xf32>
    %24 = arith.addf %23, %22 : vector<8x128xf32>
    %25 = arith.divf %23, %24 : vector<8x128xf32>
    %26 = vector.extract_strided_slice %19 {offsets = [0, 128], sizes = [8, 128], strides = [1, 1]} : vector<8x512xf32> to vector<8x128xf32>
    %27 = arith.negf %26 : vector<8x128xf32>
    %28 = math.exp %27 : vector<8x128xf32>
    %cst_19 = arith.constant 1.000000e+00 : f32
    %29 = vector.broadcast %cst_19 : f32 to vector<8x128xf32>
    %30 = arith.addf %29, %28 : vector<8x128xf32>
    %31 = arith.divf %29, %30 : vector<8x128xf32>
    %32 = vector.extract_strided_slice %19 {offsets = [0, 256], sizes = [8, 128], strides = [1, 1]} : vector<8x512xf32> to vector<8x128xf32>
    %33 = math.tanh %32 : vector<8x128xf32>
    %34 = vector.extract_strided_slice %19 {offsets = [0, 384], sizes = [8, 128], strides = [1, 1]} : vector<8x512xf32> to vector<8x128xf32>
    %35 = arith.negf %34 : vector<8x128xf32>
    %36 = math.exp %35 : vector<8x128xf32>
    %cst_20 = arith.constant 1.000000e+00 : f32
    %37 = vector.broadcast %cst_20 : f32 to vector<8x128xf32>
    %38 = arith.addf %37, %36 : vector<8x128xf32>
    %39 = arith.divf %37, %38 : vector<8x128xf32>
    %40 = arith.mulf %31, %12 : vector<8x128xf32>
    %41 = arith.mulf %25, %33 : vector<8x128xf32>
    %42 = arith.addf %40, %41 : vector<8x128xf32>
    %43 = math.tanh %42 : vector<8x128xf32>
    %44 = arith.mulf %39, %43 : vector<8x128xf32>
    %c1_i32 = arith.constant 1 : i32
    %c8_i32_21 = arith.constant 8 : i32
    %45 = arith.muli %c1_i32, %c8_i32_21 : i32
    %46 = tpu.assume_multiple %45, 8 : i32
    %47 = arith.index_cast %46 : i32 to index
    %c0_22 = arith.constant 0 : index
    %48 = vector.load %arg8[%47, %c0_22] : memref<64x512xf32, #tpu.memory_space<vmem>>, vector<8x512xf32>
    %c0_23 = arith.constant 0 : index
    %c0_24 = arith.constant 0 : index
    %49 = vector.load %arg4[%c0_23, %c0_24] : memref<128x512xf32, #tpu.memory_space<vmem>>, vector<128x512xf32>
    %cst_25 = arith.constant dense<0.000000e+00> : vector<8x512xf32>
    %50 = tpu.matmul %44, %49, %cst_25 {dimension_numbers = #tpu.dot_dimension_numbers<[1], [0], [0], [1], [0, 0, 1, 1], [], []>} : vector<8x128xf32>, vector<128x512xf32>, vector<8x512xf32> -> vector<8x512xf32>
    %51 = arith.addf %48, %50 : vector<8x512xf32>
    %52 = vector.extract_strided_slice %51 {offsets = [0, 0], sizes = [8, 128], strides = [1, 1]} : vector<8x512xf32> to vector<8x128xf32>
    %53 = arith.negf %52 : vector<8x128xf32>
    %54 = math.exp %53 : vector<8x128xf32>
    %cst_26 = arith.constant 1.000000e+00 : f32
    %55 = vector.broadcast %cst_26 : f32 to vector<8x128xf32>
    %56 = arith.addf %55, %54 : vector<8x128xf32>
    %57 = arith.divf %55, %56 : vector<8x128xf32>
    %58 = vector.extract_strided_slice %51 {offsets = [0, 128], sizes = [8, 128], strides = [1, 1]} : vector<8x512xf32> to vector<8x128xf32>
    %59 = arith.negf %58 : vector<8x128xf32>
    %60 = math.exp %59 : vector<8x128xf32>
    %cst_27 = arith.constant 1.000000e+00 : f32
    %61 = vector.broadcast %cst_27 : f32 to vector<8x128xf32>
    %62 = arith.addf %61, %60 : vector<8x128xf32>
    %63 = arith.divf %61, %62 : vector<8x128xf32>
    %64 = vector.extract_strided_slice %51 {offsets = [0, 256], sizes = [8, 128], strides = [1, 1]} : vector<8x512xf32> to vector<8x128xf32>
    %65 = math.tanh %64 : vector<8x128xf32>
    %66 = vector.extract_strided_slice %51 {offsets = [0, 384], sizes = [8, 128], strides = [1, 1]} : vector<8x512xf32> to vector<8x128xf32>
    %67 = arith.negf %66 : vector<8x128xf32>
    %68 = math.exp %67 : vector<8x128xf32>
    %cst_28 = arith.constant 1.000000e+00 : f32
    %69 = vector.broadcast %cst_28 : f32 to vector<8x128xf32>
    %70 = arith.addf %69, %68 : vector<8x128xf32>
    %71 = arith.divf %69, %70 : vector<8x128xf32>
    %72 = arith.mulf %63, %42 : vector<8x128xf32>
    %73 = arith.mulf %57, %65 : vector<8x128xf32>
    %74 = arith.addf %72, %73 : vector<8x128xf32>
    %75 = math.tanh %74 : vector<8x128xf32>
    %76 = arith.mulf %71, %75 : vector<8x128xf32>
    %c2_i32 = arith.constant 2 : i32
    %c8_i32_29 = arith.constant 8 : i32
    %77 = arith.muli %c2_i32, %c8_i32_29 : i32
    %78 = tpu.assume_multiple %77, 8 : i32
    %79 = arith.index_cast %78 : i32 to index
    %c0_30 = arith.constant 0 : index
    %80 = vector.load %arg8[%79, %c0_30] : memref<64x512xf32, #tpu.memory_space<vmem>>, vector<8x512xf32>
    %c0_31 = arith.constant 0 : index
    %c0_32 = arith.constant 0 : index
    %81 = vector.load %arg4[%c0_31, %c0_32] : memref<128x512xf32, #tpu.memory_space<vmem>>, vector<128x512xf32>
    %cst_33 = arith.constant dense<0.000000e+00> : vector<8x512xf32>
    %82 = tpu.matmul %76, %81, %cst_33 {dimension_numbers = #tpu.dot_dimension_numbers<[1], [0], [0], [1], [0, 0, 1, 1], [], []>} : vector<8x128xf32>, vector<128x512xf32>, vector<8x512xf32> -> vector<8x512xf32>
    %83 = arith.addf %80, %82 : vector<8x512xf32>
    %84 = vector.extract_strided_slice %83 {offsets = [0, 0], sizes = [8, 128], strides = [1, 1]} : vector<8x512xf32> to vector<8x128xf32>
    %85 = arith.negf %84 : vector<8x128xf32>
    %86 = math.exp %85 : vector<8x128xf32>
    %cst_34 = arith.constant 1.000000e+00 : f32
    %87 = vector.broadcast %cst_34 : f32 to vector<8x128xf32>
    %88 = arith.addf %87, %86 : vector<8x128xf32>
    %89 = arith.divf %87, %88 : vector<8x128xf32>
    %90 = vector.extract_strided_slice %83 {offsets = [0, 128], sizes = [8, 128], strides = [1, 1]} : vector<8x512xf32> to vector<8x128xf32>
    %91 = arith.negf %90 : vector<8x128xf32>
    %92 = math.exp %91 : vector<8x128xf32>
    %cst_35 = arith.constant 1.000000e+00 : f32
    %93 = vector.broadcast %cst_35 : f32 to vector<8x128xf32>
    %94 = arith.addf %93, %92 : vector<8x128xf32>
    %95 = arith.divf %93, %94 : vector<8x128xf32>
    %96 = vector.extract_strided_slice %83 {offsets = [0, 256], sizes = [8, 128], strides = [1, 1]} : vector<8x512xf32> to vector<8x128xf32>
    %97 = math.tanh %96 : vector<8x128xf32>
    %98 = vector.extract_strided_slice %83 {offsets = [0, 384], sizes = [8, 128], strides = [1, 1]} : vector<8x512xf32> to vector<8x128xf32>
    %99 = arith.negf %98 : vector<8x128xf32>
    %100 = math.exp %99 : vector<8x128xf32>
    %cst_36 = arith.constant 1.000000e+00 : f32
    %101 = vector.broadcast %cst_36 : f32 to vector<8x128xf32>
    %102 = arith.addf %101, %100 : vector<8x128xf32>
    %103 = arith.divf %101, %102 : vector<8x128xf32>
    %104 = arith.mulf %95, %74 : vector<8x128xf32>
    %105 = arith.mulf %89, %97 : vector<8x128xf32>
    %106 = arith.addf %104, %105 : vector<8x128xf32>
    %107 = math.tanh %106 : vector<8x128xf32>
    %108 = arith.mulf %103, %107 : vector<8x128xf32>
    %c3_i32 = arith.constant 3 : i32
    %c8_i32_37 = arith.constant 8 : i32
    %109 = arith.muli %c3_i32, %c8_i32_37 : i32
    %110 = tpu.assume_multiple %109, 8 : i32
    %111 = arith.index_cast %110 : i32 to index
    %c0_38 = arith.constant 0 : index
    %112 = vector.load %arg8[%111, %c0_38] : memref<64x512xf32, #tpu.memory_space<vmem>>, vector<8x512xf32>
    %c0_39 = arith.constant 0 : index
    %c0_40 = arith.constant 0 : index
    %113 = vector.load %arg4[%c0_39, %c0_40] : memref<128x512xf32, #tpu.memory_space<vmem>>, vector<128x512xf32>
    %cst_41 = arith.constant dense<0.000000e+00> : vector<8x512xf32>
    %114 = tpu.matmul %108, %113, %cst_41 {dimension_numbers = #tpu.dot_dimension_numbers<[1], [0], [0], [1], [0, 0, 1, 1], [], []>} : vector<8x128xf32>, vector<128x512xf32>, vector<8x512xf32> -> vector<8x512xf32>
    %115 = arith.addf %112, %114 : vector<8x512xf32>
    %116 = vector.extract_strided_slice %115 {offsets = [0, 0], sizes = [8, 128], strides = [1, 1]} : vector<8x512xf32> to vector<8x128xf32>
    %117 = arith.negf %116 : vector<8x128xf32>
    %118 = math.exp %117 : vector<8x128xf32>
    %cst_42 = arith.constant 1.000000e+00 : f32
    %119 = vector.broadcast %cst_42 : f32 to vector<8x128xf32>
    %120 = arith.addf %119, %118 : vector<8x128xf32>
    %121 = arith.divf %119, %120 : vector<8x128xf32>
    %122 = vector.extract_strided_slice %115 {offsets = [0, 128], sizes = [8, 128], strides = [1, 1]} : vector<8x512xf32> to vector<8x128xf32>
    %123 = arith.negf %122 : vector<8x128xf32>
    %124 = math.exp %123 : vector<8x128xf32>
    %cst_43 = arith.constant 1.000000e+00 : f32
    %125 = vector.broadcast %cst_43 : f32 to vector<8x128xf32>
    %126 = arith.addf %125, %124 : vector<8x128xf32>
    %127 = arith.divf %125, %126 : vector<8x128xf32>
    %128 = vector.extract_strided_slice %115 {offsets = [0, 256], sizes = [8, 128], strides = [1, 1]} : vector<8x512xf32> to vector<8x128xf32>
    %129 = math.tanh %128 : vector<8x128xf32>
    %130 = vector.extract_strided_slice %115 {offsets = [0, 384], sizes = [8, 128], strides = [1, 1]} : vector<8x512xf32> to vector<8x128xf32>
    %131 = arith.negf %130 : vector<8x128xf32>
    %132 = math.exp %131 : vector<8x128xf32>
    %cst_44 = arith.constant 1.000000e+00 : f32
    %133 = vector.broadcast %cst_44 : f32 to vector<8x128xf32>
    %134 = arith.addf %133, %132 : vector<8x128xf32>
    %135 = arith.divf %133, %134 : vector<8x128xf32>
    %136 = arith.mulf %127, %106 : vector<8x128xf32>
    %137 = arith.mulf %121, %129 : vector<8x128xf32>
    %138 = arith.addf %136, %137 : vector<8x128xf32>
    %139 = math.tanh %138 : vector<8x128xf32>
    %140 = arith.mulf %135, %139 : vector<8x128xf32>
    %c4_i32 = arith.constant 4 : i32
    %c8_i32_45 = arith.constant 8 : i32
    %141 = arith.muli %c4_i32, %c8_i32_45 : i32
    %142 = tpu.assume_multiple %141, 8 : i32
    %143 = arith.index_cast %142 : i32 to index
    %c0_46 = arith.constant 0 : index
    %144 = vector.load %arg8[%143, %c0_46] : memref<64x512xf32, #tpu.memory_space<vmem>>, vector<8x512xf32>
    %c0_47 = arith.constant 0 : index
    %c0_48 = arith.constant 0 : index
    %145 = vector.load %arg4[%c0_47, %c0_48] : memref<128x512xf32, #tpu.memory_space<vmem>>, vector<128x512xf32>
    %cst_49 = arith.constant dense<0.000000e+00> : vector<8x512xf32>
    %146 = tpu.matmul %140, %145, %cst_49 {dimension_numbers = #tpu.dot_dimension_numbers<[1], [0], [0], [1], [0, 0, 1, 1], [], []>} : vector<8x128xf32>, vector<128x512xf32>, vector<8x512xf32> -> vector<8x512xf32>
    %147 = arith.addf %144, %146 : vector<8x512xf32>
    %148 = vector.extract_strided_slice %147 {offsets = [0, 0], sizes = [8, 128], strides = [1, 1]} : vector<8x512xf32> to vector<8x128xf32>
    %149 = arith.negf %148 : vector<8x128xf32>
    %150 = math.exp %149 : vector<8x128xf32>
    %cst_50 = arith.constant 1.000000e+00 : f32
    %151 = vector.broadcast %cst_50 : f32 to vector<8x128xf32>
    %152 = arith.addf %151, %150 : vector<8x128xf32>
    %153 = arith.divf %151, %152 : vector<8x128xf32>
    %154 = vector.extract_strided_slice %147 {offsets = [0, 128], sizes = [8, 128], strides = [1, 1]} : vector<8x512xf32> to vector<8x128xf32>
    %155 = arith.negf %154 : vector<8x128xf32>
    %156 = math.exp %155 : vector<8x128xf32>
    %cst_51 = arith.constant 1.000000e+00 : f32
    %157 = vector.broadcast %cst_51 : f32 to vector<8x128xf32>
    %158 = arith.addf %157, %156 : vector<8x128xf32>
    %159 = arith.divf %157, %158 : vector<8x128xf32>
    %160 = vector.extract_strided_slice %147 {offsets = [0, 256], sizes = [8, 128], strides = [1, 1]} : vector<8x512xf32> to vector<8x128xf32>
    %161 = math.tanh %160 : vector<8x128xf32>
    %162 = vector.extract_strided_slice %147 {offsets = [0, 384], sizes = [8, 128], strides = [1, 1]} : vector<8x512xf32> to vector<8x128xf32>
    %163 = arith.negf %162 : vector<8x128xf32>
    %164 = math.exp %163 : vector<8x128xf32>
    %cst_52 = arith.constant 1.000000e+00 : f32
    %165 = vector.broadcast %cst_52 : f32 to vector<8x128xf32>
    %166 = arith.addf %165, %164 : vector<8x128xf32>
    %167 = arith.divf %165, %166 : vector<8x128xf32>
    %168 = arith.mulf %159, %138 : vector<8x128xf32>
    %169 = arith.mulf %153, %161 : vector<8x128xf32>
    %170 = arith.addf %168, %169 : vector<8x128xf32>
    %171 = math.tanh %170 : vector<8x128xf32>
    %172 = arith.mulf %167, %171 : vector<8x128xf32>
    %c5_i32 = arith.constant 5 : i32
    %c8_i32_53 = arith.constant 8 : i32
    %173 = arith.muli %c5_i32, %c8_i32_53 : i32
    %174 = tpu.assume_multiple %173, 8 : i32
    %175 = arith.index_cast %174 : i32 to index
    %c0_54 = arith.constant 0 : index
    %176 = vector.load %arg8[%175, %c0_54] : memref<64x512xf32, #tpu.memory_space<vmem>>, vector<8x512xf32>
    %c0_55 = arith.constant 0 : index
    %c0_56 = arith.constant 0 : index
    %177 = vector.load %arg4[%c0_55, %c0_56] : memref<128x512xf32, #tpu.memory_space<vmem>>, vector<128x512xf32>
    %cst_57 = arith.constant dense<0.000000e+00> : vector<8x512xf32>
    %178 = tpu.matmul %172, %177, %cst_57 {dimension_numbers = #tpu.dot_dimension_numbers<[1], [0], [0], [1], [0, 0, 1, 1], [], []>} : vector<8x128xf32>, vector<128x512xf32>, vector<8x512xf32> -> vector<8x512xf32>
    %179 = arith.addf %176, %178 : vector<8x512xf32>
    %180 = vector.extract_strided_slice %179 {offsets = [0, 0], sizes = [8, 128], strides = [1, 1]} : vector<8x512xf32> to vector<8x128xf32>
    %181 = arith.negf %180 : vector<8x128xf32>
    %182 = math.exp %181 : vector<8x128xf32>
    %cst_58 = arith.constant 1.000000e+00 : f32
    %183 = vector.broadcast %cst_58 : f32 to vector<8x128xf32>
    %184 = arith.addf %183, %182 : vector<8x128xf32>
    %185 = arith.divf %183, %184 : vector<8x128xf32>
    %186 = vector.extract_strided_slice %179 {offsets = [0, 128], sizes = [8, 128], strides = [1, 1]} : vector<8x512xf32> to vector<8x128xf32>
    %187 = arith.negf %186 : vector<8x128xf32>
    %188 = math.exp %187 : vector<8x128xf32>
    %cst_59 = arith.constant 1.000000e+00 : f32
    %189 = vector.broadcast %cst_59 : f32 to vector<8x128xf32>
    %190 = arith.addf %189, %188 : vector<8x128xf32>
    %191 = arith.divf %189, %190 : vector<8x128xf32>
    %192 = vector.extract_strided_slice %179 {offsets = [0, 256], sizes = [8, 128], strides = [1, 1]} : vector<8x512xf32> to vector<8x128xf32>
    %193 = math.tanh %192 : vector<8x128xf32>
    %194 = vector.extract_strided_slice %179 {offsets = [0, 384], sizes = [8, 128], strides = [1, 1]} : vector<8x512xf32> to vector<8x128xf32>
    %195 = arith.negf %194 : vector<8x128xf32>
    %196 = math.exp %195 : vector<8x128xf32>
    %cst_60 = arith.constant 1.000000e+00 : f32
    %197 = vector.broadcast %cst_60 : f32 to vector<8x128xf32>
    %198 = arith.addf %197, %196 : vector<8x128xf32>
    %199 = arith.divf %197, %198 : vector<8x128xf32>
    %200 = arith.mulf %191, %170 : vector<8x128xf32>
    %201 = arith.mulf %185, %193 : vector<8x128xf32>
    %202 = arith.addf %200, %201 : vector<8x128xf32>
    %203 = math.tanh %202 : vector<8x128xf32>
    %204 = arith.mulf %199, %203 : vector<8x128xf32>
    %c6_i32 = arith.constant 6 : i32
    %c8_i32_61 = arith.constant 8 : i32
    %205 = arith.muli %c6_i32, %c8_i32_61 : i32
    %206 = tpu.assume_multiple %205, 8 : i32
    %207 = arith.index_cast %206 : i32 to index
    %c0_62 = arith.constant 0 : index
    %208 = vector.load %arg8[%207, %c0_62] : memref<64x512xf32, #tpu.memory_space<vmem>>, vector<8x512xf32>
    %c0_63 = arith.constant 0 : index
    %c0_64 = arith.constant 0 : index
    %209 = vector.load %arg4[%c0_63, %c0_64] : memref<128x512xf32, #tpu.memory_space<vmem>>, vector<128x512xf32>
    %cst_65 = arith.constant dense<0.000000e+00> : vector<8x512xf32>
    %210 = tpu.matmul %204, %209, %cst_65 {dimension_numbers = #tpu.dot_dimension_numbers<[1], [0], [0], [1], [0, 0, 1, 1], [], []>} : vector<8x128xf32>, vector<128x512xf32>, vector<8x512xf32> -> vector<8x512xf32>
    %211 = arith.addf %208, %210 : vector<8x512xf32>
    %212 = vector.extract_strided_slice %211 {offsets = [0, 0], sizes = [8, 128], strides = [1, 1]} : vector<8x512xf32> to vector<8x128xf32>
    %213 = arith.negf %212 : vector<8x128xf32>
    %214 = math.exp %213 : vector<8x128xf32>
    %cst_66 = arith.constant 1.000000e+00 : f32
    %215 = vector.broadcast %cst_66 : f32 to vector<8x128xf32>
    %216 = arith.addf %215, %214 : vector<8x128xf32>
    %217 = arith.divf %215, %216 : vector<8x128xf32>
    %218 = vector.extract_strided_slice %211 {offsets = [0, 128], sizes = [8, 128], strides = [1, 1]} : vector<8x512xf32> to vector<8x128xf32>
    %219 = arith.negf %218 : vector<8x128xf32>
    %220 = math.exp %219 : vector<8x128xf32>
    %cst_67 = arith.constant 1.000000e+00 : f32
    %221 = vector.broadcast %cst_67 : f32 to vector<8x128xf32>
    %222 = arith.addf %221, %220 : vector<8x128xf32>
    %223 = arith.divf %221, %222 : vector<8x128xf32>
    %224 = vector.extract_strided_slice %211 {offsets = [0, 256], sizes = [8, 128], strides = [1, 1]} : vector<8x512xf32> to vector<8x128xf32>
    %225 = math.tanh %224 : vector<8x128xf32>
    %226 = vector.extract_strided_slice %211 {offsets = [0, 384], sizes = [8, 128], strides = [1, 1]} : vector<8x512xf32> to vector<8x128xf32>
    %227 = arith.negf %226 : vector<8x128xf32>
    %228 = math.exp %227 : vector<8x128xf32>
    %cst_68 = arith.constant 1.000000e+00 : f32
    %229 = vector.broadcast %cst_68 : f32 to vector<8x128xf32>
    %230 = arith.addf %229, %228 : vector<8x128xf32>
    %231 = arith.divf %229, %230 : vector<8x128xf32>
    %232 = arith.mulf %223, %202 : vector<8x128xf32>
    %233 = arith.mulf %217, %225 : vector<8x128xf32>
    %234 = arith.addf %232, %233 : vector<8x128xf32>
    %235 = math.tanh %234 : vector<8x128xf32>
    %236 = arith.mulf %231, %235 : vector<8x128xf32>
    %c7_i32 = arith.constant 7 : i32
    %c8_i32_69 = arith.constant 8 : i32
    %237 = arith.muli %c7_i32, %c8_i32_69 : i32
    %238 = tpu.assume_multiple %237, 8 : i32
    %239 = arith.index_cast %238 : i32 to index
    %c0_70 = arith.constant 0 : index
    %240 = vector.load %arg8[%239, %c0_70] : memref<64x512xf32, #tpu.memory_space<vmem>>, vector<8x512xf32>
    %c0_71 = arith.constant 0 : index
    %c0_72 = arith.constant 0 : index
    %241 = vector.load %arg4[%c0_71, %c0_72] : memref<128x512xf32, #tpu.memory_space<vmem>>, vector<128x512xf32>
    %cst_73 = arith.constant dense<0.000000e+00> : vector<8x512xf32>
    %242 = tpu.matmul %236, %241, %cst_73 {dimension_numbers = #tpu.dot_dimension_numbers<[1], [0], [0], [1], [0, 0, 1, 1], [], []>} : vector<8x128xf32>, vector<128x512xf32>, vector<8x512xf32> -> vector<8x512xf32>
    %243 = arith.addf %240, %242 : vector<8x512xf32>
    %244 = vector.extract_strided_slice %243 {offsets = [0, 0], sizes = [8, 128], strides = [1, 1]} : vector<8x512xf32> to vector<8x128xf32>
    %245 = arith.negf %244 : vector<8x128xf32>
    %246 = math.exp %245 : vector<8x128xf32>
    %cst_74 = arith.constant 1.000000e+00 : f32
    %247 = vector.broadcast %cst_74 : f32 to vector<8x128xf32>
    %248 = arith.addf %247, %246 : vector<8x128xf32>
    %249 = arith.divf %247, %248 : vector<8x128xf32>
    %250 = vector.extract_strided_slice %243 {offsets = [0, 128], sizes = [8, 128], strides = [1, 1]} : vector<8x512xf32> to vector<8x128xf32>
    %251 = arith.negf %250 : vector<8x128xf32>
    %252 = math.exp %251 : vector<8x128xf32>
    %cst_75 = arith.constant 1.000000e+00 : f32
    %253 = vector.broadcast %cst_75 : f32 to vector<8x128xf32>
    %254 = arith.addf %253, %252 : vector<8x128xf32>
    %255 = arith.divf %253, %254 : vector<8x128xf32>
    %256 = vector.extract_strided_slice %243 {offsets = [0, 256], sizes = [8, 128], strides = [1, 1]} : vector<8x512xf32> to vector<8x128xf32>
    %257 = math.tanh %256 : vector<8x128xf32>
    %258 = vector.extract_strided_slice %243 {offsets = [0, 384], sizes = [8, 128], strides = [1, 1]} : vector<8x512xf32> to vector<8x128xf32>
    %259 = arith.negf %258 : vector<8x128xf32>
    %260 = math.exp %259 : vector<8x128xf32>
    %cst_76 = arith.constant 1.000000e+00 : f32
    %261 = vector.broadcast %cst_76 : f32 to vector<8x128xf32>
    %262 = arith.addf %261, %260 : vector<8x128xf32>
    %263 = arith.divf %261, %262 : vector<8x128xf32>
    %264 = arith.mulf %255, %234 : vector<8x128xf32>
    %265 = arith.mulf %249, %257 : vector<8x128xf32>
    %266 = arith.addf %264, %265 : vector<8x128xf32>
    %267 = math.tanh %266 : vector<8x128xf32>
    %268 = arith.mulf %263, %267 : vector<8x128xf32>
    %c8_i32_77 = arith.constant 8 : i32
    %c0_78 = arith.constant 0 : index
    %c0_79 = arith.constant 0 : index
    %269 = vector.load %arg9[%c0_78, %c0_79] : memref<8x128xf32, #tpu.memory_space<vmem>>, vector<8x128xf32>
    tpu.vector_store %arg9[%c0_78, %c0_79], %268 {strides = array<i32>} : memref<8x128xf32, #tpu.memory_space<vmem>>, vector<8x128xf32>,
    %c0_80 = arith.constant 0 : index
    %c0_81 = arith.constant 0 : index
    %270 = vector.load %arg10[%c0_80, %c0_81] : memref<8x128xf32, #tpu.memory_space<vmem>>, vector<8x128xf32>
    tpu.vector_store %arg10[%c0_80, %c0_81], %266 {strides = array<i32>} : memref<8x128xf32, #tpu.memory_space<vmem>>, vector<8x128xf32>,
    %c0_i32_82 = arith.constant 0 : i32
    %271 = arith.cmpi eq, %arg1, %c0_i32_82 : i32
    %272 = arith.extui %271 : i1 to i32
    %c0_i32_83 = arith.constant 0 : i32
    %273 = arith.cmpi ne, %272, %c0_i32_83 : i32
    scf.if %273 {
      %c0_84 = arith.constant 0 : index
      %c0_85 = arith.constant 0 : index
      %274 = vector.load %arg6[%c0_84, %c0_85] : memref<8x128xf32, #tpu.memory_space<vmem>>, vector<8x128xf32>
      tpu.vector_store %arg6[%c0_84, %c0_85], %268 {strides = array<i32>} : memref<8x128xf32, #tpu.memory_space<vmem>>, vector<8x128xf32>,
      %c0_86 = arith.constant 0 : index
      %c0_87 = arith.constant 0 : index
      %275 = vector.load %arg7[%c0_86, %c0_87] : memref<8x128xf32, #tpu.memory_space<vmem>>, vector<8x128xf32>
      tpu.vector_store %arg7[%c0_86, %c0_87], %266 {strides = array<i32>} : memref<8x128xf32, #tpu.memory_space<vmem>>, vector<8x128xf32>,
    } else {
    }
    return
  }
  func.func @transform_0(%arg0: i32, %arg1: i32) -> (i32, i32, i32) {
    %c0_i32 = arith.constant 0 : i32
    %c0_i32_0 = arith.constant 0 : i32
    return %arg1, %arg0, %c0_i32 : i32, i32, i32
  }
  func.func @transform_1(%arg0: i32, %arg1: i32) -> (i32, i32) {
    %c0_i32 = arith.constant 0 : i32
    %c0_i32_0 = arith.constant 0 : i32
    %c0_i32_1 = arith.constant 0 : i32
    return %c0_i32, %c0_i32_0 : i32, i32
  }
  func.func @transform_2(%arg0: i32, %arg1: i32) -> (i32, i32) {
    %c0_i32 = arith.constant 0 : i32
    %c0_i32_0 = arith.constant 0 : i32
    %c0_i32_1 = arith.constant 0 : i32
    return %c0_i32, %c0_i32_0 : i32, i32
  }
  func.func @transform_3(%arg0: i32, %arg1: i32) -> (i32, i32) {
    %c0_i32 = arith.constant 0 : i32
    %c0_i32_0 = arith.constant 0 : i32
    %c0_i32_1 = arith.constant 0 : i32
    return %c0_i32, %c0_i32_0 : i32, i32
  }
  func.func @transform_4(%arg0: i32, %arg1: i32) -> (i32, i32) {
    %c0_i32 = arith.constant 0 : i32
    %c0_i32_0 = arith.constant 0 : i32
    return %arg0, %c0_i32 : i32, i32
  }
  func.func @transform_5(%arg0: i32, %arg1: i32) -> (i32, i32) {
    %c0_i32 = arith.constant 0 : i32
    %c0_i32_0 = arith.constant 0 : i32
    return %arg0, %c0_i32 : i32, i32
  }
}

</mosaic_0001>

<llo_original>
// kernel: tpu_custom_call.1
$region0: #{tpu_custom_call.1}
  #allocation0 [shape = 'u32[]', space=smem, size = 0x4, offset = 0x4, fixed_abs, tag = 'smem constant byte address 0x4 - core index']
  #allocation1 [shape = 'u32[144,128]{1,0:T(1,128)}', space=vmem, size = 0x12000, scoped, tag = 'internal scratch']
  #allocation2 [shape = 'f32[64,512]{1,0:T(8,128)}', space=vmem, size = 0x20000, scoped, tag = 'scratch operand']
  #allocation3 [shape = 'f32[8,128]{1,0:T(8,128)}', space=vmem, size = 0x1000, scoped, tag = 'scratch operand']
  #allocation4 [shape = 'f32[8,128]{1,0:T(8,128)}', space=vmem, size = 0x1000, scoped, tag = 'scratch operand']
  %s0 = inlined_call_operand.hbm [shape: f32[8,8,128], index: 0, kind: input, shape index: {}]
  %s1 = inlined_call_operand.hbm [shape: f32[128,512], index: 1, kind: input, shape index: {}]
  %s2 = inlined_call_operand.hbm [shape: f32[128,512], index: 2, kind: input, shape index: {}]
  %s3 = inlined_call_operand.vmem [shape: f32[1,512], index: 3, kind: input, shape index: {}]
  %s4 = inlined_call_operand.hbm [shape: f32[8,128], index: 4, kind: output, shape index: {0}]
  %s5 = inlined_call_operand.hbm [shape: f32[8,128], index: 5, kind: output, shape index: {1}]
  %6 = xla_tuple %s4, %s5
  %s7 = sld [smem:[#allocation0]]
  $region54: #{tpu_custom_call.1} parent=0
    _
  %s9 = ssub.s32 1, %s7
  %s10 = scalar_select 0, %s9, %s7
  $region1: #{tpu_custom_call.1} parent=0
    #allocation5 [shape = 'u8[32768]{0}', space=vmem, size = 0x8000, scoped, tag = 'input window, operand 0, single buffered']
    #allocation6 [shape = 's32[1]{0}', space=sflag, size = 0x4, scoped, tag = 'scoped memory for tpu_custom_call.1']
    #allocation7 [shape = 's32[1]{0}', space=sflag, size = 0x4, scoped, tag = 'scoped memory for tpu_custom_call.1']
    #allocation8 [shape = 'u8[262144]{0}', space=vmem, size = 0x40000, scoped, tag = 'input window, operand 1, single buffered']
    #allocation9 [shape = 's32[1]{0}', space=sflag, size = 0x4, scoped, tag = 'scoped memory for tpu_custom_call.1']
    #allocation10 [shape = 'u8[262144]{0}', space=vmem, size = 0x40000, scoped, tag = 'input window, operand 2, single buffered']
    #allocation11 [shape = 'u8[4096]{0}', space=vmem, size = 0x1000, scoped, tag = 'output window, operand 0, single buffered']
    #allocation12 [shape = 'u8[4096]{0}', space=vmem, size = 0x1000, scoped, tag = 'output window, operand 1, single buffered']
    #allocation13 [shape = 's32[1]{0}', space=sflag, size = 0x4, scoped, tag = 'scoped memory for tpu_custom_call.1']
    %11 = vsyncpa [#allocation6], 0
    %12 = vsyncpa [#allocation9], 0
    %13 = vsyncpa [#allocation7], 0
    %14 = vsyncpa [#allocation13], 0
    // Predicated region
    $region2: #{tpu_custom_call.1} parent=1 // pred_check
      _
    $region3: #{tpu_custom_call.1} parent=1 // pred_check_branch
      %16 = sbr.rel (0) target = $region5
    $region4: #{tpu_custom_call.1} parent=1 // pred_region
      %s18 = ssub.s32 1024, 1024
      %19 = vsyncadd [#allocation6], %s18
      %s20 = sshll.u32 [#allocation5], 4
      %s21 = int_to_ptr.vmem [resolvable:$true] %s20
      %26 = dma.hbm_to_vmem [thread:$0]  %s0, 1024, %s21, [#allocation6], 128, 128, 8
    $region5: #{tpu_custom_call.1} parent=1 // pred_fallthru
      _
    // Predicated region
    $region6: #{tpu_custom_call.1} parent=1 // pred_check
      _
    $region7: #{tpu_custom_call.1} parent=1 // pred_check_branch
      %28 = sbr.rel (0) target = $region9
    $region8: #{tpu_custom_call.1} parent=1 // pred_region
      %s30 = ssub.s32 8192, 8192
      %31 = vsyncadd [#allocation9], %s30
      %s32 = sshll.u32 [#allocation8], 4
      %s33 = int_to_ptr.vmem [resolvable:$true] %s32
      %38 = dma.hbm_to_vmem [thread:$0]  %s1, 8192, %s33, [#allocation9], 512, 512, 32
    $region9: #{tpu_custom_call.1} parent=1 // pred_fallthru
      _
    // Predicated region
    $region10: #{tpu_custom_call.1} parent=1 // pred_check
      _
    $region11: #{tpu_custom_call.1} parent=1 // pred_check_branch
      %40 = sbr.rel (0) target = $region13
    $region12: #{tpu_custom_call.1} parent=1 // pred_region
      %s42 = ssub.s32 8192, 8192
      %43 = vsyncadd [#allocation9], %s42
      %s44 = sshll.u32 [#allocation10], 4
      %s45 = int_to_ptr.vmem [resolvable:$true] %s44
      %50 = dma.hbm_to_vmem [thread:$0]  %s2, 8192, %s45, [#allocation9], 512, 512, 32
    $region13: #{tpu_custom_call.1} parent=1 // pred_fallthru
      _
    // Predicated region
    $region14: #{tpu_custom_call.1} parent=1 // pred_check
      _
    $region15: #{tpu_custom_call.1} parent=1 // pred_check_branch
      %52 = sbr.rel (0) target = $region17
    $region16: #{tpu_custom_call.1} parent=1 // pred_region
      _
    $region17: #{tpu_custom_call.1} parent=1 // pred_fallthru
      _
    // Predicated region
    $region18: #{tpu_custom_call.1} parent=1 // pred_check
      _
    $region19: #{tpu_custom_call.1} parent=1 // pred_check_branch
      %54 = sbr.rel (0) target = $region21
    $region20: #{tpu_custom_call.1} parent=1 // pred_region
      %55 = dma.done [#allocation6], 1024
    $region21: #{tpu_custom_call.1} parent=1 // pred_fallthru
      _
    // Predicated region
    $region22: #{tpu_custom_call.1} parent=1 // pred_check
      _
    $region23: #{tpu_custom_call.1} parent=1 // pred_check_branch
      %57 = sbr.rel (0) target = $region25
    $region24: #{tpu_custom_call.1} parent=1 // pred_region
      %58 = dma.done [#allocation9], 8192
    $region25: #{tpu_custom_call.1} parent=1 // pred_fallthru
      _
    // Predicated region
    $region26: #{tpu_custom_call.1} parent=1 // pred_check
      _
    $region27: #{tpu_custom_call.1} parent=1 // pred_check_branch
      %60 = sbr.rel (0) target = $region29
    $region28: #{tpu_custom_call.1} parent=1 // pred_region
      %61 = dma.done [#allocation9], 8192
    $region29: #{tpu_custom_call.1} parent=1 // pred_fallthru
      _
    %v62 = vld [vmem:[#allocation5] sm:$0xff]
    %v63 = vld [vmem:[#allocation5 + $0x8] sm:$0xff]
    %v64 = vld [vmem:[#allocation5 + $0x10] sm:$0xff]
    %v65 = vld [vmem:[#allocation5 + $0x18] sm:$0xff]
    %v66 = vld [vmem:[#allocation5 + $0x20] sm:$0xff]
    %v67 = vld [vmem:[#allocation5 + $0x28] sm:$0xff]
    %v68 = vld [vmem:[#allocation5 + $0x30] sm:$0xff]
    %v69 = vld [vmem:[#allocation5 + $0x38] sm:$0xff]
    %v70 = vld [vmem:[#allocation8] sm:$0xff]
    %v71 = vld [vmem:[#allocation8 + $0x8] sm:$0xff]
    %v72 = vld [vmem:[#allocation8 + $0x10] sm:$0xff]
    %v73 = vld [vmem:[#allocation8 + $0x18] sm:$0xff]
    %v74 = vld [vmem:[#allocation8 + $0x20] sm:$0xff]
    %v75 = vld [vmem:[#allocation8 + $0x28] sm:$0xff]
    %v76 = vld [vmem:[#allocation8 + $0x30] sm:$0xff]
    %v77 = vld [vmem:[#allocation8 + $0x38] sm:$0xff]
    %v78 = vld [vmem:[#allocation8 + $0x40] sm:$0xff]
    %v79 = vld [vmem:[#allocation8 + $0x48] sm:$0xff]
    %v80 = vld [vmem:[#allocation8 + $0x50] sm:$0xff]
    %v81 = vld [vmem:[#allocation8 + $0x58] sm:$0xff]
    %v82 = vld [vmem:[#allocation8 + $0x60] sm:$0xff]
    %v83 = vld [vmem:[#allocation8 + $0x68] sm:$0xff]
    %v84 = vld [vmem:[#allocation8 + $0x70] sm:$0xff]
    %v85 = vld [vmem:[#allocation8 + $0x78] sm:$0xff]
    %v86 = vld [vmem:[#allocation8 + $0x80] sm:$0xff]
    %v87 = vld [vmem:[#allocation8 + $0x88] sm:$0xff]
    %v88 = vld [vmem:[#allocation8 + $0x90] sm:$0xff]
    %v89 = vld [vmem:[#allocation8 + $0x98] sm:$0xff]
    %v90 = vld [vmem:[#allocation8 + $0xa0] sm:$0xff]
    %v91 = vld [vmem:[#allocation8 + $0xa8] sm:$0xff]
    %v92 = vld [vmem:[#allocation8 + $0xb0] sm:$0xff]
    %v93 = vld [vmem:[#allocation8 + $0xb8] sm:$0xff]
    %v94 = vld [vmem:[#allocation8 + $0xc0] sm:$0xff]
    %v95 = vld [vmem:[#allocation8 + $0xc8] sm:$0xff]
    %v96 = vld [vmem:[#allocation8 + $0xd0] sm:$0xff]
    %v97 = vld [vmem:[#allocation8 + $0xd8] sm:$0xff]
    %v98 = vld [vmem:[#allocation8 + $0xe0] sm:$0xff]
    %v99 = vld [vmem:[#allocation8 + $0xe8] sm:$0xff]
    %v100 = vld [vmem:[#allocation8 + $0xf0] sm:$0xff]
    %v101 = vld [vmem:[#allocation8 + $0xf8] sm:$0xff]
    %v102 = vld [vmem:[#allocation8 + $0x100] sm:$0xff]
    %v103 = vld [vmem:[#allocation8 + $0x108] sm:$0xff]
    %v104 = vld [vmem:[#allocation8 + $0x110] sm:$0xff]
    %v105 = vld [vmem:[#allocation8 + $0x118] sm:$0xff]
    %v106 = vld [vmem:[#allocation8 + $0x120] sm:$0xff]
    %v107 = vld [vmem:[#allocation8 + $0x128] sm:$0xff]
    %v108 = vld [vmem:[#allocation8 + $0x130] sm:$0xff]
    %v109 = vld [vmem:[#allocation8 + $0x138] sm:$0xff]
    %v110 = vld [vmem:[#allocation8 + $0x140] sm:$0xff]
    %v111 = vld [vmem:[#allocation8 + $0x148] sm:$0xff]
    %v112 = vld [vmem:[#allocation8 + $0x150] sm:$0xff]
    %v113 = vld [vmem:[#allocation8 + $0x158] sm:$0xff]
    %v114 = vld [vmem:[#allocation8 + $0x160] sm:$0xff]
    %v115 = vld [vmem:[#allocation8 + $0x168] sm:$0xff]
    %v116 = vld [vmem:[#allocation8 + $0x170] sm:$0xff]
    %v117 = vld [vmem:[#allocation8 + $0x178] sm:$0xff]
    %v118 = vld [vmem:[#allocation8 + $0x180] sm:$0xff]
    %v119 = vld [vmem:[#allocation8 + $0x188] sm:$0xff]
    %v120 = vld [vmem:[#allocation8 + $0x190] sm:$0xff]
    %v121 = vld [vmem:[#allocation8 + $0x198] sm:$0xff]
    %v122 = vld [vmem:[#allocation8 + $0x1a0] sm:$0xff]
    %v123 = vld [vmem:[#allocation8 + $0x1a8] sm:$0xff]
    %v124 = vld [vmem:[#allocation8 + $0x1b0] sm:$0xff]
    %v125 = vld [vmem:[#allocation8 + $0x1b8] sm:$0xff]
    %v126 = vld [vmem:[#allocation8 + $0x1c0] sm:$0xff]
    %v127 = vld [vmem:[#allocation8 + $0x1c8] sm:$0xff]
    %v128 = vld [vmem:[#allocation8 + $0x1d0] sm:$0xff]
    %v129 = vld [vmem:[#allocation8 + $0x1d8] sm:$0xff]
    %v130 = vld [vmem:[#allocation8 + $0x1e0] sm:$0xff]
    %v131 = vld [vmem:[#allocation8 + $0x1e8] sm:$0xff]
    %v132 = vld [vmem:[#allocation8 + $0x1f0] sm:$0xff]
    %v133 = vld [vmem:[#allocation8 + $0x1f8] sm:$0xff]
    %v134 = vld [vmem:[%s3] sm:$0xf]
    %v136 = vlaneseq
    %v137 = vshrl.u32 %v136, 7
    %v138 = vsub.s32 0, %v137
    %v139 = vrot.slane %v134, %v138
    %v140 = vlaneseq
    %v141 = vshrl.u32 %v140, 7
    %v142 = vsub.s32 1, %v141
    %v143 = vrot.slane %v134, %v142
    %v144 = vlaneseq
    %v145 = vshrl.u32 %v144, 7
    %v146 = vsub.s32 2, %v145
    %v147 = vrot.slane %v134, %v146
    %v148 = vlaneseq
    %v149 = vshrl.u32 %v148, 7
    %v150 = vsub.s32 3, %v149
    %v151 = vrot.slane %v134, %v150
    %156 = vmatprep.subr.mxu0 %v71
    %157 = vmatpush1.msra.mxu0 %v70
    %158 = vmatprep.subr.mxu0 %v75
    %159 = vmatpush1.msra.mxu0 %v74
    %160 = vmatprep.subr.mxu0 %v79
    %161 = vmatpush1.msra.mxu0 %v78
    %162 = vmatprep.subr.mxu0 %v83
    %163 = vmatpush1.msra.mxu0 %v82
    %164 = vmatprep.subr.mxu0 %v87
    %165 = vmatpush1.msra.mxu0 %v86
    %166 = vmatprep.subr.mxu0 %v91
    %167 = vmatpush1.msra.mxu0 %v90
    %168 = vmatprep.subr.mxu0 %v95
    %169 = vmatpush1.msra.mxu0 %v94
    %170 = vmatprep.subr.mxu0 %v99
    %171 = vmatpush1.msra.mxu0 %v98
    %172 = vmatprep.subr.mxu0 %v103
    %173 = vmatpush1.msra.mxu0 %v102
    %174 = vmatprep.subr.mxu0 %v107
    %175 = vmatpush1.msra.mxu0 %v106
    %176 = vmatprep.subr.mxu0 %v111
    %177 = vmatpush1.msra.mxu0 %v110
    %178 = vmatprep.subr.mxu0 %v115
    %179 = vmatpush1.msra.mxu0 %v114
    %180 = vmatprep.subr.mxu0 %v119
    %181 = vmatpush1.msra.mxu0 %v118
    %182 = vmatprep.subr.mxu0 %v123
    %183 = vmatpush1.msra.mxu0 %v122
    %184 = vmatprep.subr.mxu0 %v127
    %185 = vmatpush1.msra.mxu0 %v126
    %186 = vmatprep.subr.mxu0 %v131
    %187 = vmatpush1.msra.mxu0 %v130
    %188 = vmatprep.subr.mxu0 0.0
    %189 = vmatpush1.msra.mxu0 0.0
    %190 = vmatprep.subr.mxu0 0.0
    %191 = vmatpush1.msra.mxu0 0.0
    %192 = vmatprep.subr.mxu0 0.0
    %193 = vmatpush1.msra.mxu0 0.0
    %194 = vmatprep.subr.mxu0 0.0
    %195 = vmatpush1.msra.mxu0 0.0
    %196 = vmatprep.subr.mxu0 0.0
    %197 = vmatpush1.msra.mxu0 0.0
    %198 = vmatprep.subr.mxu0 0.0
    %199 = vmatpush1.msra.mxu0 0.0
    %200 = vmatprep.subr.mxu0 0.0
    %201 = vmatpush1.msra.mxu0 0.0
    %202 = vmatprep.subr.mxu0 0.0
    %203 = vmatpush1.msra.mxu0 0.0
    %204 = vmatprep.subr.mxu0 0.0
    %205 = vmatpush1.msra.mxu0 0.0
    %206 = vmatprep.subr.mxu0 0.0
    %207 = vmatpush1.msra.mxu0 0.0
    %208 = vmatprep.subr.mxu0 0.0
    %209 = vmatpush1.msra.mxu0 0.0
    %210 = vmatprep.subr.mxu0 0.0
    %211 = vmatpush1.msra.mxu0 0.0
    %212 = vmatprep.subr.mxu0 0.0
    %213 = vmatpush1.msra.mxu0 0.0
    %214 = vmatprep.subr.mxu0 0.0
    %215 = vmatpush1.msra.mxu0 0.0
    %216 = vmatprep.subr.mxu0 0.0
    %217 = vmatpush1.msra.mxu0 0.0
    %218 = vmatprep.subr.mxu0 0.0
    %219 = vmatpush1.msra.mxu0 0.0
    %220 = vmatprep.mubr.f32.mxu0 0.0
    %221 = vmatmul.mubr.f32.gmra.mrb[0].mxu0 %v62
    %v222 = vpop.f32.mrb[0].mxu0
    %v223 = vadd.f32 %v139, %v222
    %v224 = vpop.f32.mrb[0].mxu0
    %v225 = vadd.f32 %v143, %v224
    %226 = vmatprep.mubr.f32.mxu0 0.0
    %227 = vmatmul.mubr.f32.gmra.mrb[0].mxu0 %v63
    %v228 = vpop.f32.mrb[0].mxu0
    %v229 = vadd.f32 %v139, %v228
    %v230 = vpop.f32.mrb[0].mxu0
    %v231 = vadd.f32 %v143, %v230
    %232 = vmatprep.mubr.f32.mxu0 0.0
    %233 = vmatmul.mubr.f32.gmra.mrb[0].mxu0 %v64
    %v234 = vpop.f32.mrb[0].mxu0
    %v235 = vadd.f32 %v139, %v234
    %v236 = vpop.f32.mrb[0].mxu0
    %v237 = vadd.f32 %v143, %v236
    %238 = vmatprep.mubr.f32.mxu0 0.0
    %239 = vmatmul.mubr.f32.gmra.mrb[0].mxu0 %v65
    %v240 = vpop.f32.mrb[0].mxu0
    %v241 = vadd.f32 %v139, %v240
    %v242 = vpop.f32.mrb[0].mxu0
    %v243 = vadd.f32 %v143, %v242
    %244 = vmatprep.mubr.f32.mxu0 0.0
    %245 = vmatmul.mubr.f32.gmra.mrb[0].mxu0 %v66
    %v246 = vpop.f32.mrb[0].mxu0
    %v247 = vadd.f32 %v139, %v246
    %v248 = vpop.f32.mrb[0].mxu0
    %v249 = vadd.f32 %v143, %v248
    %250 = vmatprep.mubr.f32.mxu0 0.0
    %251 = vmatmul.mubr.f32.gmra.mrb[0].mxu0 %v67
    %v252 = vpop.f32.mrb[0].mxu0
    %v253 = vadd.f32 %v139, %v252
    %v254 = vpop.f32.mrb[0].mxu0
    %v255 = vadd.f32 %v143, %v254
    %256 = vmatprep.mubr.f32.mxu0 0.0
    %257 = vmatmul.mubr.f32.gmra.mrb[0].mxu0 %v68
    %v258 = vpop.f32.mrb[0].mxu0
    %v259 = vadd.f32 %v139, %v258
    %v260 = vpop.f32.mrb[0].mxu0
    %v261 = vadd.f32 %v143, %v260
    %262 = vmatprep.mubr.f32.mxu0 0.0
    %263 = vmatmul.mubr.f32.gmra.mrb[0].mxu0 %v69
    %v264 = vpop.f32.mrb[0].mxu0
    %v265 = vadd.f32 %v139, %v264
    %v266 = vpop.f32.mrb[0].mxu0
    %v267 = vadd.f32 %v143, %v266
    %268 = vdwg.mxu0
    %269 = vmatprep.subr.mxu0 %v73
    %270 = vmatpush1.msra.mxu0 %v72
    %271 = vmatprep.subr.mxu0 %v77
    %272 = vmatpush1.msra.mxu0 %v76
    %273 = vmatprep.subr.mxu0 %v81
    %274 = vmatpush1.msra.mxu0 %v80
    %275 = vmatprep.subr.mxu0 %v85
    %276 = vmatpush1.msra.mxu0 %v84
    %277 = vmatprep.subr.mxu0 %v89
    %278 = vmatpush1.msra.mxu0 %v88
    %279 = vmatprep.subr.mxu0 %v93
    %280 = vmatpush1.msra.mxu0 %v92
    %281 = vmatprep.subr.mxu0 %v97
    %282 = vmatpush1.msra.mxu0 %v96
    %283 = vmatprep.subr.mxu0 %v101
    %284 = vmatpush1.msra.mxu0 %v100
    %285 = vmatprep.subr.mxu0 %v105
    %286 = vmatpush1.msra.mxu0 %v104
    %287 = vmatprep.subr.mxu0 %v109
    %288 = vmatpush1.msra.mxu0 %v108
    %289 = vmatprep.subr.mxu0 %v113
    %290 = vmatpush1.msra.mxu0 %v112
    %291 = vmatprep.subr.mxu0 %v117
    %292 = vmatpush1.msra.mxu0 %v116
    %293 = vmatprep.subr.mxu0 %v121
    %294 = vmatpush1.msra.mxu0 %v120
    %295 = vmatprep.subr.mxu0 %v125
    %296 = vmatpush1.msra.mxu0 %v124
    %297 = vmatprep.subr.mxu0 %v129
    %298 = vmatpush1.msra.mxu0 %v128
    %299 = vmatprep.subr.mxu0 %v133
    %300 = vmatpush1.msra.mxu0 %v132
    %301 = vmatprep.subr.mxu0 0.0
    %302 = vmatpush1.msra.mxu0 0.0
    %303 = vmatprep.subr.mxu0 0.0
    %304 = vmatpush1.msra.mxu0 0.0
    %305 = vmatprep.subr.mxu0 0.0
    %306 = vmatpush1.msra.mxu0 0.0
    %307 = vmatprep.subr.mxu0 0.0
    %308 = vmatpush1.msra.mxu0 0.0
    %309 = vmatprep.subr.mxu0 0.0
    %310 = vmatpush1.msra.mxu0 0.0
    %311 = vmatprep.subr.mxu0 0.0
    %312 = vmatpush1.msra.mxu0 0.0
    %313 = vmatprep.subr.mxu0 0.0
    %314 = vmatpush1.msra.mxu0 0.0
    %315 = vmatprep.subr.mxu0 0.0
    %316 = vmatpush1.msra.mxu0 0.0
    %317 = vmatprep.subr.mxu0 0.0
    %318 = vmatpush1.msra.mxu0 0.0
    %319 = vmatprep.subr.mxu0 0.0
    %320 = vmatpush1.msra.mxu0 0.0
    %321 = vmatprep.subr.mxu0 0.0
    %322 = vmatpush1.msra.mxu0 0.0
    %323 = vmatprep.subr.mxu0 0.0
    %324 = vmatpush1.msra.mxu0 0.0
    %325 = vmatprep.subr.mxu0 0.0
    %326 = vmatpush1.msra.mxu0 0.0
    %327 = vmatprep.subr.mxu0 0.0
    %328 = vmatpush1.msra.mxu0 0.0
    %329 = vmatprep.subr.mxu0 0.0
    %330 = vmatpush1.msra.mxu0 0.0
    %331 = vmatprep.subr.mxu0 0.0
    %332 = vmatpush1.msra.mxu0 0.0
    %333 = vmatprep.mubr.f32.mxu0 0.0
    %334 = vmatmul.mubr.f32.gmra.mrb[0].mxu0 %v62
    %v335 = vpop.f32.mrb[0].mxu0
    %v336 = vadd.f32 %v147, %v335
    %v337 = vpop.f32.mrb[0].mxu0
    %v338 = vadd.f32 %v151, %v337
    %339 = vmatprep.mubr.f32.mxu0 0.0
    %340 = vmatmul.mubr.f32.gmra.mrb[0].mxu0 %v63
    %v341 = vpop.f32.mrb[0].mxu0
    %v342 = vadd.f32 %v147, %v341
    %v343 = vpop.f32.mrb[0].mxu0
    %v344 = vadd.f32 %v151, %v343
    %345 = vmatprep.mubr.f32.mxu0 0.0
    %346 = vmatmul.mubr.f32.gmra.mrb[0].mxu0 %v64
    %v347 = vpop.f32.mrb[0].mxu0
    %v348 = vadd.f32 %v147, %v347
    %v349 = vpop.f32.mrb[0].mxu0
    %v350 = vadd.f32 %v151, %v349
    %351 = vmatprep.mubr.f32.mxu0 0.0
    %352 = vmatmul.mubr.f32.gmra.mrb[0].mxu0 %v65
    %v353 = vpop.f32.mrb[0].mxu0
    %v354 = vadd.f32 %v147, %v353
    %v355 = vpop.f32.mrb[0].mxu0
    %v356 = vadd.f32 %v151, %v355
    %357 = vmatprep.mubr.f32.mxu0 0.0
    %358 = vmatmul.mubr.f32.gmra.mrb[0].mxu0 %v66
    %v359 = vpop.f32.mrb[0].mxu0
    %v360 = vadd.f32 %v147, %v359
    %v361 = vpop.f32.mrb[0].mxu0
    %v362 = vadd.f32 %v151, %v361
    %363 = vmatprep.mubr.f32.mxu0 0.0
    %364 = vmatmul.mubr.f32.gmra.mrb[0].mxu0 %v67
    %v365 = vpop.f32.mrb[0].mxu0
    %v366 = vadd.f32 %v147, %v365
    %v367 = vpop.f32.mrb[0].mxu0
    %v368 = vadd.f32 %v151, %v367
    %369 = vmatprep.mubr.f32.mxu0 0.0
    %370 = vmatmul.mubr.f32.gmra.mrb[0].mxu0 %v68
    %v371 = vpop.f32.mrb[0].mxu0
    %v372 = vadd.f32 %v147, %v371
    %v373 = vpop.f32.mrb[0].mxu0
    %v374 = vadd.f32 %v151, %v373
    %375 = vmatprep.mubr.f32.mxu0 0.0
    %376 = vmatmul.mubr.f32.gmra.mrb[0].mxu0 %v69
    %v377 = vpop.f32.mrb[0].mxu0
    %v378 = vadd.f32 %v147, %v377
    %v379 = vpop.f32.mrb[0].mxu0
    %v380 = vadd.f32 %v151, %v379
    %381 = vdwg.mxu0
    %382 = vst [vmem:[#allocation2] sm:$0xff] %v223
    %383 = vst [vmem:[#allocation2 + $0x8] sm:$0xff] %v225
    %384 = vst [vmem:[#allocation2 + $0x10] sm:$0xff] %v336
    %385 = vst [vmem:[#allocation2 + $0x18] sm:$0xff] %v338
    %386 = vst [vmem:[#allocation2 + $0x20] sm:$0xff] %v229
    %387 = vst [vmem:[#allocation2 + $0x28] sm:$0xff] %v231
    %388 = vst [vmem:[#allocation2 + $0x30] sm:$0xff] %v342
    %389 = vst [vmem:[#allocation2 + $0x38] sm:$0xff] %v344
    %390 = vst [vmem:[#allocation2 + $0x40] sm:$0xff] %v235
    %391 = vst [vmem:[#allocation2 + $0x48] sm:$0xff] %v237
    %392 = vst [vmem:[#allocation2 + $0x50] sm:$0xff] %v348
    %393 = vst [vmem:[#allocation2 + $0x58] sm:$0xff] %v350
    %394 = vst [vmem:[#allocation2 + $0x60] sm:$0xff] %v241
    %395 = vst [vmem:[#allocation2 + $0x68] sm:$0xff] %v243
    %396 = vst [vmem:[#allocation2 + $0x70] sm:$0xff] %v354
    %397 = vst [vmem:[#allocation2 + $0x78] sm:$0xff] %v356
    %398 = vst [vmem:[#allocation2 + $0x80] sm:$0xff] %v247
    %399 = vst [vmem:[#allocation2 + $0x88] sm:$0xff] %v249
    %400 = vst [vmem:[#allocation2 + $0x90] sm:$0xff] %v360
    %401 = vst [vmem:[#allocation2 + $0x98] sm:$0xff] %v362
    %402 = vst [vmem:[#allocation2 + $0xa0] sm:$0xff] %v253
    %403 = vst [vmem:[#allocation2 + $0xa8] sm:$0xff] %v255
    %404 = vst [vmem:[#allocation2 + $0xb0] sm:$0xff] %v366
    %405 = vst [vmem:[#allocation2 + $0xb8] sm:$0xff] %v368
    %406 = vst [vmem:[#allocation2 + $0xc0] sm:$0xff] %v259
    %407 = vst [vmem:[#allocation2 + $0xc8] sm:$0xff] %v261
    %408 = vst [vmem:[#allocation2 + $0xd0] sm:$0xff] %v372
    %409 = vst [vmem:[#allocation2 + $0xd8] sm:$0xff] %v374
    %410 = vst [vmem:[#allocation2 + $0xe0] sm:$0xff] %v265
    %411 = vst [vmem:[#allocation2 + $0xe8] sm:$0xff] %v267
    %412 = vst [vmem:[#allocation2 + $0xf0] sm:$0xff] %v378
    %413 = vst [vmem:[#allocation2 + $0xf8] sm:$0xff] %v380
    %p414 = scmp.eq.s32.totalorder 0, 0
    // Predicated region
    $region30: #{tpu_custom_call.1} parent=1 // pred_check
      %p415 = pneg %p414
    $region31: #{tpu_custom_call.1} parent=1 // pred_check_branch
      %417 = sbr.rel (%p415) target = $region33
    $region32: #{tpu_custom_call.1} parent=1 // pred_region
      %418 = vst [vmem:[#allocation3] sm:$0xff] 0.0
      %419 = vst [vmem:[#allocation4] sm:$0xff] 0.0
    $region33: #{tpu_custom_call.1} parent=1 // pred_fallthru
      _
    %v420 = vld [vmem:[#allocation3] sm:$0xff]
    %v421 = vld [vmem:[#allocation4] sm:$0xff]
    %s422 = smul.u32 0, 4
    %s423 = smul.addr %s422, 8
    %s424 = scalar_lea.vmem [#allocation2], %s423
    %v425 = vld [vmem:[%s424] sm:$0xff]
    %v426 = vld [vmem:[%s424 + $0x8] sm:$0xff]
    %v427 = vld [vmem:[%s424 + $0x10] sm:$0xff]
    %v428 = vld [vmem:[%s424 + $0x18] sm:$0xff]
    %v429 = vld [vmem:[#allocation10] sm:$0xff]
    %v430 = vld [vmem:[#allocation10 + $0x8] sm:$0xff]
    %v431 = vld [vmem:[#allocation10 + $0x10] sm:$0xff]
    %v432 = vld [vmem:[#allocation10 + $0x18] sm:$0xff]
    %v433 = vld [vmem:[#allocation10 + $0x20] sm:$0xff]
    %v434 = vld [vmem:[#allocation10 + $0x28] sm:$0xff]
    %v435 = vld [vmem:[#allocation10 + $0x30] sm:$0xff]
    %v436 = vld [vmem:[#allocation10 + $0x38] sm:$0xff]
    %v437 = vld [vmem:[#allocation10 + $0x40] sm:$0xff]
    %v438 = vld [vmem:[#allocation10 + $0x48] sm:$0xff]
    %v439 = vld [vmem:[#allocation10 + $0x50] sm:$0xff]
    %v440 = vld [vmem:[#allocation10 + $0x58] sm:$0xff]
    %v441 = vld [vmem:[#allocation10 + $0x60] sm:$0xff]
    %v442 = vld [vmem:[#allocation10 + $0x68] sm:$0xff]
    %v443 = vld [vmem:[#allocation10 + $0x70] sm:$0xff]
    %v444 = vld [vmem:[#allocation10 + $0x78] sm:$0xff]
    %v445 = vld [vmem:[#allocation10 + $0x80] sm:$0xff]
    %v446 = vld [vmem:[#allocation10 + $0x88] sm:$0xff]
    %v447 = vld [vmem:[#allocation10 + $0x90] sm:$0xff]
    %v448 = vld [vmem:[#allocation10 + $0x98] sm:$0xff]
    %v449 = vld [vmem:[#allocation10 + $0xa0] sm:$0xff]
    %v450 = vld [vmem:[#allocation10 + $0xa8] sm:$0xff]
    %v451 = vld [vmem:[#allocation10 + $0xb0] sm:$0xff]
    %v452 = vld [vmem:[#allocation10 + $0xb8] sm:$0xff]
    %v453 = vld [vmem:[#allocation10 + $0xc0] sm:$0xff]
    %v454 = vld [vmem:[#allocation10 + $0xc8] sm:$0xff]
    %v455 = vld [vmem:[#allocation10 + $0xd0] sm:$0xff]
    %v456 = vld [vmem:[#allocation10 + $0xd8] sm:$0xff]
    %v457 = vld [vmem:[#allocation10 + $0xe0] sm:$0xff]
    %v458 = vld [vmem:[#allocation10 + $0xe8] sm:$0xff]
    %v459 = vld [vmem:[#allocation10 + $0xf0] sm:$0xff]
    %v460 = vld [vmem:[#allocation10 + $0xf8] sm:$0xff]
    %v461 = vld [vmem:[#allocation10 + $0x100] sm:$0xff]
    %v462 = vld [vmem:[#allocation10 + $0x108] sm:$0xff]
    %v463 = vld [vmem:[#allocation10 + $0x110] sm:$0xff]
    %v464 = vld [vmem:[#allocation10 + $0x118] sm:$0xff]
    %v465 = vld [vmem:[#allocation10 + $0x120] sm:$0xff]
    %v466 = vld [vmem:[#allocation10 + $0x128] sm:$0xff]
    %v467 = vld [vmem:[#allocation10 + $0x130] sm:$0xff]
    %v468 = vld [vmem:[#allocation10 + $0x138] sm:$0xff]
    %v469 = vld [vmem:[#allocation10 + $0x140] sm:$0xff]
    %v470 = vld [vmem:[#allocation10 + $0x148] sm:$0xff]
    %v471 = vld [vmem:[#allocation10 + $0x150] sm:$0xff]
    %v472 = vld [vmem:[#allocation10 + $0x158] sm:$0xff]
    %v473 = vld [vmem:[#allocation10 + $0x160] sm:$0xff]
    %v474 = vld [vmem:[#allocation10 + $0x168] sm:$0xff]
    %v475 = vld [vmem:[#allocation10 + $0x170] sm:$0xff]
    %v476 = vld [vmem:[#allocation10 + $0x178] sm:$0xff]
    %v477 = vld [vmem:[#allocation10 + $0x180] sm:$0xff]
    %v478 = vld [vmem:[#allocation10 + $0x188] sm:$0xff]
    %v479 = vld [vmem:[#allocation10 + $0x190] sm:$0xff]
    %v480 = vld [vmem:[#allocation10 + $0x198] sm:$0xff]
    %v481 = vld [vmem:[#allocation10 + $0x1a0] sm:$0xff]
    %v482 = vld [vmem:[#allocation10 + $0x1a8] sm:$0xff]
    %v483 = vld [vmem:[#allocation10 + $0x1b0] sm:$0xff]
    %v484 = vld [vmem:[#allocation10 + $0x1b8] sm:$0xff]
    %v485 = vld [vmem:[#allocation10 + $0x1c0] sm:$0xff]
    %v486 = vld [vmem:[#allocation10 + $0x1c8] sm:$0xff]
    %v487 = vld [vmem:[#allocation10 + $0x1d0] sm:$0xff]
    %v488 = vld [vmem:[#allocation10 + $0x1d8] sm:$0xff]
    %v489 = vld [vmem:[#allocation10 + $0x1e0] sm:$0xff]
    %v490 = vld [vmem:[#allocation10 + $0x1e8] sm:$0xff]
    %v491 = vld [vmem:[#allocation10 + $0x1f0] sm:$0xff]
    %v492 = vld [vmem:[#allocation10 + $0x1f8] sm:$0xff]
    %493 = vmatprep.subr.mxu0 %v430
    %494 = vmatpush1.msra.mxu0 %v429
    %495 = vmatprep.subr.mxu0 %v434
    %496 = vmatpush1.msra.mxu0 %v433
    %497 = vmatprep.subr.mxu0 %v438
    %498 = vmatpush1.msra.mxu0 %v437
    %499 = vmatprep.subr.mxu0 %v442
    %500 = vmatpush1.msra.mxu0 %v441
    %501 = vmatprep.subr.mxu0 %v446
    %502 = vmatpush1.msra.mxu0 %v445
    %503 = vmatprep.subr.mxu0 %v450
    %504 = vmatpush1.msra.mxu0 %v449
    %505 = vmatprep.subr.mxu0 %v454
    %506 = vmatpush1.msra.mxu0 %v453
    %507 = vmatprep.subr.mxu0 %v458
    %508 = vmatpush1.msra.mxu0 %v457
    %509 = vmatprep.subr.mxu0 %v462
    %510 = vmatpush1.msra.mxu0 %v461
    %511 = vmatprep.subr.mxu0 %v466
    %512 = vmatpush1.msra.mxu0 %v465
    %513 = vmatprep.subr.mxu0 %v470
    %514 = vmatpush1.msra.mxu0 %v469
    %515 = vmatprep.subr.mxu0 %v474
    %516 = vmatpush1.msra.mxu0 %v473
    %517 = vmatprep.subr.mxu0 %v478
    %518 = vmatpush1.msra.mxu0 %v477
    %519 = vmatprep.subr.mxu0 %v482
    %520 = vmatpush1.msra.mxu0 %v481
    %521 = vmatprep.subr.mxu0 %v486
    %522 = vmatpush1.msra.mxu0 %v485
    %523 = vmatprep.subr.mxu0 %v490
    %524 = vmatpush1.msra.mxu0 %v489
    %525 = vmatprep.subr.mxu0 0.0
    %526 = vmatpush1.msra.mxu0 0.0
    %527 = vmatprep.subr.mxu0 0.0
    %528 = vmatpush1.msra.mxu0 0.0
    %529 = vmatprep.subr.mxu0 0.0
    %530 = vmatpush1.msra.mxu0 0.0
    %531 = vmatprep.subr.mxu0 0.0
    %532 = vmatpush1.msra.mxu0 0.0
    %533 = vmatprep.subr.mxu0 0.0
    %534 = vmatpush1.msra.mxu0 0.0
    %535 = vmatprep.subr.mxu0 0.0
    %536 = vmatpush1.msra.mxu0 0.0
    %537 = vmatprep.subr.mxu0 0.0
    %538 = vmatpush1.msra.mxu0 0.0
    %539 = vmatprep.subr.mxu0 0.0
    %540 = vmatpush1.msra.mxu0 0.0
    %541 = vmatprep.subr.mxu0 0.0
    %542 = vmatpush1.msra.mxu0 0.0
    %543 = vmatprep.subr.mxu0 0.0
    %544 = vmatpush1.msra.mxu0 0.0
    %545 = vmatprep.subr.mxu0 0.0
    %546 = vmatpush1.msra.mxu0 0.0
    %547 = vmatprep.subr.mxu0 0.0
    %548 = vmatpush1.msra.mxu0 0.0
    %549 = vmatprep.subr.mxu0 0.0
    %550 = vmatpush1.msra.mxu0 0.0
    %551 = vmatprep.subr.mxu0 0.0
    %552 = vmatpush1.msra.mxu0 0.0
    %553 = vmatprep.subr.mxu0 0.0
    %554 = vmatpush1.msra.mxu0 0.0
    %555 = vmatprep.subr.mxu0 0.0
    %556 = vmatpush1.msra.mxu0 0.0
    %557 = vmatprep.mubr.f32.mxu0 0.0
    %558 = vmatmul.mubr.f32.gmra.mrb[0].mxu0 %v420
    %v559 = vpop.f32.mrb[0].mxu0
    %v560 = vadd.f32 0.0, %v559
    %v561 = vpop.f32.mrb[0].mxu0
    %v562 = vadd.f32 0.0, %v561
    %563 = vdwg.mxu0
    %564 = vmatprep.subr.mxu0 %v432
    %565 = vmatpush1.msra.mxu0 %v431
    %566 = vmatprep.subr.mxu0 %v436
    %567 = vmatpush1.msra.mxu0 %v435
    %568 = vmatprep.subr.mxu0 %v440
    %569 = vmatpush1.msra.mxu0 %v439
    %570 = vmatprep.subr.mxu0 %v444
    %571 = vmatpush1.msra.mxu0 %v443
    %572 = vmatprep.subr.mxu0 %v448
    %573 = vmatpush1.msra.mxu0 %v447
    %574 = vmatprep.subr.mxu0 %v452
    %575 = vmatpush1.msra.mxu0 %v451
    %576 = vmatprep.subr.mxu0 %v456
    %577 = vmatpush1.msra.mxu0 %v455
    %578 = vmatprep.subr.mxu0 %v460
    %579 = vmatpush1.msra.mxu0 %v459
    %580 = vmatprep.subr.mxu0 %v464
    %581 = vmatpush1.msra.mxu0 %v463
    %582 = vmatprep.subr.mxu0 %v468
    %583 = vmatpush1.msra.mxu0 %v467
    %584 = vmatprep.subr.mxu0 %v472
    %585 = vmatpush1.msra.mxu0 %v471
    %586 = vmatprep.subr.mxu0 %v476
    %587 = vmatpush1.msra.mxu0 %v475
    %588 = vmatprep.subr.mxu0 %v480
    %589 = vmatpush1.msra.mxu0 %v479
    %590 = vmatprep.subr.mxu0 %v484
    %591 = vmatpush1.msra.mxu0 %v483
    %592 = vmatprep.subr.mxu0 %v488
    %593 = vmatpush1.msra.mxu0 %v487
    %594 = vmatprep.subr.mxu0 %v492
    %595 = vmatpush1.msra.mxu0 %v491
    %596 = vmatprep.subr.mxu0 0.0
    %597 = vmatpush1.msra.mxu0 0.0
    %598 = vmatprep.subr.mxu0 0.0
    %599 = vmatpush1.msra.mxu0 0.0
    %600 = vmatprep.subr.mxu0 0.0
    %601 = vmatpush1.msra.mxu0 0.0
    %602 = vmatprep.subr.mxu0 0.0
    %603 = vmatpush1.msra.mxu0 0.0
    %604 = vmatprep.subr.mxu0 0.0
    %605 = vmatpush1.msra.mxu0 0.0
    %606 = vmatprep.subr.mxu0 0.0
    %607 = vmatpush1.msra.mxu0 0.0
    %608 = vmatprep.subr.mxu0 0.0
    %609 = vmatpush1.msra.mxu0 0.0
    %610 = vmatprep.subr.mxu0 0.0
    %611 = vmatpush1.msra.mxu0 0.0
    %612 = vmatprep.subr.mxu0 0.0
    %613 = vmatpush1.msra.mxu0 0.0
    %614 = vmatprep.subr.mxu0 0.0
    %615 = vmatpush1.msra.mxu0 0.0
    %616 = vmatprep.subr.mxu0 0.0
    %617 = vmatpush1.msra.mxu0 0.0
    %618 = vmatprep.subr.mxu0 0.0
    %619 = vmatpush1.msra.mxu0 0.0
    %620 = vmatprep.subr.mxu0 0.0
    %621 = vmatpush1.msra.mxu0 0.0
    %622 = vmatprep.subr.mxu0 0.0
    %623 = vmatpush1.msra.mxu0 0.0
    %624 = vmatprep.subr.mxu0 0.0
    %625 = vmatpush1.msra.mxu0 0.0
    %626 = vmatprep.subr.mxu0 0.0
    %627 = vmatpush1.msra.mxu0 0.0
    %628 = vmatprep.mubr.f32.mxu0 0.0
    %629 = vmatmul.mubr.f32.gmra.mrb[0].mxu0 %v420
    %v630 = vpop.f32.mrb[0].mxu0
    %v631 = vadd.f32 0.0, %v630
    %v632 = vpop.f32.mrb[0].mxu0
    %v633 = vadd.f32 0.0, %v632
    %634 = vdwg.mxu0
    %v635 = vadd.f32 %v425, %v560
    %v636 = vadd.f32 %v426, %v562
    %v637 = vadd.f32 %v427, %v631
    %v638 = vadd.f32 %v428, %v633
    %v639 = vxor.u32 %v635, 2147483648
    %v640 = vmul.f32 %v639, 1.442695
    %v641 = vpow.pop %v640
    %v642 = vadd.f32 %v641, 1.0
    %v643 = vrcp.pop %v642
    %v644 = vmul.f32 1.0, %v643
    %v645 = vxor.u32 %v636, 2147483648
    %v646 = vmul.f32 %v645, 1.442695
    %v647 = vpow.pop %v646
    %v648 = vadd.f32 %v647, 1.0
    %v649 = vrcp.pop %v648
    %v650 = vmul.f32 1.0, %v649
    %v651 = vtanh.pop %v637
    %v652 = vxor.u32 %v638, 2147483648
    %v653 = vmul.f32 %v652, 1.442695
    %v654 = vpow.pop %v653
    %v655 = vadd.f32 %v654, 1.0
    %v656 = vrcp.pop %v655
    %v657 = vmul.f32 1.0, %v656
    %v658 = vmul.f32 %v650, %v421
    %v659 = vmul.f32 %v644, %v651
    %v660 = vadd.f32 %v658, %v659
    %v661 = vtanh.pop %v660
    %v662 = vmul.f32 %v657, %v661
    %s663 = smul.u32 1, 4
    %s664 = smul.addr %s663, 8
    %s665 = scalar_lea.vmem [#allocation2], %s664
    %v666 = vld [vmem:[%s665] sm:$0xff]
    %v667 = vld [vmem:[%s665 + $0x8] sm:$0xff]
    %v668 = vld [vmem:[%s665 + $0x10] sm:$0xff]
    %v669 = vld [vmem:[%s665 + $0x18] sm:$0xff]
    %670 = vmatprep.subr.mxu0 %v430
    %671 = vmatpush1.msra.mxu0 %v429
    %672 = vmatprep.subr.mxu0 %v434
    %673 = vmatpush1.msra.mxu0 %v433
    %674 = vmatprep.subr.mxu0 %v438
    %675 = vmatpush1.msra.mxu0 %v437
    %676 = vmatprep.subr.mxu0 %v442
    %677 = vmatpush1.msra.mxu0 %v441
    %678 = vmatprep.subr.mxu0 %v446
    %679 = vmatpush1.msra.mxu0 %v445
    %680 = vmatprep.subr.mxu0 %v450
    %681 = vmatpush1.msra.mxu0 %v449
    %682 = vmatprep.subr.mxu0 %v454
    %683 = vmatpush1.msra.mxu0 %v453
    %684 = vmatprep.subr.mxu0 %v458
    %685 = vmatpush1.msra.mxu0 %v457
    %686 = vmatprep.subr.mxu0 %v462
    %687 = vmatpush1.msra.mxu0 %v461
    %688 = vmatprep.subr.mxu0 %v466
    %689 = vmatpush1.msra.mxu0 %v465
    %690 = vmatprep.subr.mxu0 %v470
    %691 = vmatpush1.msra.mxu0 %v469
    %692 = vmatprep.subr.mxu0 %v474
    %693 = vmatpush1.msra.mxu0 %v473
    %694 = vmatprep.subr.mxu0 %v478
    %695 = vmatpush1.msra.mxu0 %v477
    %696 = vmatprep.subr.mxu0 %v482
    %697 = vmatpush1.msra.mxu0 %v481
    %698 = vmatprep.subr.mxu0 %v486
    %699 = vmatpush1.msra.mxu0 %v485
    %700 = vmatprep.subr.mxu0 %v490
    %701 = vmatpush1.msra.mxu0 %v489
    %702 = vmatprep.subr.mxu0 0.0
    %703 = vmatpush1.msra.mxu0 0.0
    %704 = vmatprep.subr.mxu0 0.0
    %705 = vmatpush1.msra.mxu0 0.0
    %706 = vmatprep.subr.mxu0 0.0
    %707 = vmatpush1.msra.mxu0 0.0
    %708 = vmatprep.subr.mxu0 0.0
    %709 = vmatpush1.msra.mxu0 0.0
    %710 = vmatprep.subr.mxu0 0.0
    %711 = vmatpush1.msra.mxu0 0.0
    %712 = vmatprep.subr.mxu0 0.0
    %713 = vmatpush1.msra.mxu0 0.0
    %714 = vmatprep.subr.mxu0 0.0
    %715 = vmatpush1.msra.mxu0 0.0
    %716 = vmatprep.subr.mxu0 0.0
    %717 = vmatpush1.msra.mxu0 0.0
    %718 = vmatprep.subr.mxu0 0.0
    %719 = vmatpush1.msra.mxu0 0.0
    %720 = vmatprep.subr.mxu0 0.0
    %721 = vmatpush1.msra.mxu0 0.0
    %722 = vmatprep.subr.mxu0 0.0
    %723 = vmatpush1.msra.mxu0 0.0
    %724 = vmatprep.subr.mxu0 0.0
    %725 = vmatpush1.msra.mxu0 0.0
    %726 = vmatprep.subr.mxu0 0.0
    %727 = vmatpush1.msra.mxu0 0.0
    %728 = vmatprep.subr.mxu0 0.0
    %729 = vmatpush1.msra.mxu0 0.0
    %730 = vmatprep.subr.mxu0 0.0
    %731 = vmatpush1.msra.mxu0 0.0
    %732 = vmatprep.subr.mxu0 0.0
    %733 = vmatpush1.msra.mxu0 0.0
    %734 = vmatprep.mubr.f32.mxu0 0.0
    %735 = vmatmul.mubr.f32.gmra.mrb[0].mxu0 %v662
    %v736 = vpop.f32.mrb[0].mxu0
    %v737 = vadd.f32 0.0, %v736
    %v738 = vpop.f32.mrb[0].mxu0
    %v739 = vadd.f32 0.0, %v738
    %740 = vdwg.mxu0
    %741 = vmatprep.subr.mxu0 %v432
    %742 = vmatpush1.msra.mxu0 %v431
    %743 = vmatprep.subr.mxu0 %v436
    %744 = vmatpush1.msra.mxu0 %v435
    %745 = vmatprep.subr.mxu0 %v440
    %746 = vmatpush1.msra.mxu0 %v439
    %747 = vmatprep.subr.mxu0 %v444
    %748 = vmatpush1.msra.mxu0 %v443
    %749 = vmatprep.subr.mxu0 %v448
    %750 = vmatpush1.msra.mxu0 %v447
    %751 = vmatprep.subr.mxu0 %v452
    %752 = vmatpush1.msra.mxu0 %v451
    %753 = vmatprep.subr.mxu0 %v456
    %754 = vmatpush1.msra.mxu0 %v455
    %755 = vmatprep.subr.mxu0 %v460
    %756 = vmatpush1.msra.mxu0 %v459
    %757 = vmatprep.subr.mxu0 %v464
    %758 = vmatpush1.msra.mxu0 %v463
    %759 = vmatprep.subr.mxu0 %v468
    %760 = vmatpush1.msra.mxu0 %v467
    %761 = vmatprep.subr.mxu0 %v472
    %762 = vmatpush1.msra.mxu0 %v471
    %763 = vmatprep.subr.mxu0 %v476
    %764 = vmatpush1.msra.mxu0 %v475
    %765 = vmatprep.subr.mxu0 %v480
    %766 = vmatpush1.msra.mxu0 %v479
    %767 = vmatprep.subr.mxu0 %v484
    %768 = vmatpush1.msra.mxu0 %v483
    %769 = vmatprep.subr.mxu0 %v488
    %770 = vmatpush1.msra.mxu0 %v487
    %771 = vmatprep.subr.mxu0 %v492
    %772 = vmatpush1.msra.mxu0 %v491
    %773 = vmatprep.subr.mxu0 0.0
    %774 = vmatpush1.msra.mxu0 0.0
    %775 = vmatprep.subr.mxu0 0.0
    %776 = vmatpush1.msra.mxu0 0.0
    %777 = vmatprep.subr.mxu0 0.0
    %778 = vmatpush1.msra.mxu0 0.0
    %779 = vmatprep.subr.mxu0 0.0
    %780 = vmatpush1.msra.mxu0 0.0
    %781 = vmatprep.subr.mxu0 0.0
    %782 = vmatpush1.msra.mxu0 0.0
    %783 = vmatprep.subr.mxu0 0.0
    %784 = vmatpush1.msra.mxu0 0.0
    %785 = vmatprep.subr.mxu0 0.0
    %786 = vmatpush1.msra.mxu0 0.0
    %787 = vmatprep.subr.mxu0 0.0
    %788 = vmatpush1.msra.mxu0 0.0
    %789 = vmatprep.subr.mxu0 0.0
    %790 = vmatpush1.msra.mxu0 0.0
    %791 = vmatprep.subr.mxu0 0.0
    %792 = vmatpush1.msra.mxu0 0.0
    %793 = vmatprep.subr.mxu0 0.0
    %794 = vmatpush1.msra.mxu0 0.0
    %795 = vmatprep.subr.mxu0 0.0
    %796 = vmatpush1.msra.mxu0 0.0
    %797 = vmatprep.subr.mxu0 0.0
    %798 = vmatpush1.msra.mxu0 0.0
    %799 = vmatprep.subr.mxu0 0.0
    %800 = vmatpush1.msra.mxu0 0.0
    %801 = vmatprep.subr.mxu0 0.0
    %802 = vmatpush1.msra.mxu0 0.0
    %803 = vmatprep.subr.mxu0 0.0
    %804 = vmatpush1.msra.mxu0 0.0
    %805 = vmatprep.mubr.f32.mxu0 0.0
    %806 = vmatmul.mubr.f32.gmra.mrb[0].mxu0 %v662
    %v807 = vpop.f32.mrb[0].mxu0
    %v808 = vadd.f32 0.0, %v807
    %v809 = vpop.f32.mrb[0].mxu0
    %v810 = vadd.f32 0.0, %v809
    %811 = vdwg.mxu0
    %v812 = vadd.f32 %v666, %v737
    %v813 = vadd.f32 %v667, %v739
    %v814 = vadd.f32 %v668, %v808
    %v815 = vadd.f32 %v669, %v810
    %v816 = vxor.u32 %v812, 2147483648
    %v817 = vmul.f32 %v816, 1.442695
    %v818 = vpow.pop %v817
    %v819 = vadd.f32 %v818, 1.0
    %v820 = vrcp.pop %v819
    %v821 = vmul.f32 1.0, %v820
    %v822 = vxor.u32 %v813, 2147483648
    %v823 = vmul.f32 %v822, 1.442695
    %v824 = vpow.pop %v823
    %v825 = vadd.f32 %v824, 1.0
    %v826 = vrcp.pop %v825
    %v827 = vmul.f32 1.0, %v826
    %v828 = vtanh.pop %v814
    %v829 = vxor.u32 %v815, 2147483648
    %v830 = vmul.f32 %v829, 1.442695
    %v831 = vpow.pop %v830
    %v832 = vadd.f32 %v831, 1.0
    %v833 = vrcp.pop %v832
    %v834 = vmul.f32 1.0, %v833
    %v835 = vmul.f32 %v827, %v660
    %v836 = vmul.f32 %v821, %v828
    %v837 = vadd.f32 %v835, %v836
    %v838 = vtanh.pop %v837
    %v839 = vmul.f32 %v834, %v838
    %s840 = smul.u32 2, 4
    %s841 = smul.addr %s840, 8
    %s842 = scalar_lea.vmem [#allocation2], %s841
    %v843 = vld [vmem:[%s842] sm:$0xff]
    %v844 = vld [vmem:[%s842 + $0x8] sm:$0xff]
    %v845 = vld [vmem:[%s842 + $0x10] sm:$0xff]
    %v846 = vld [vmem:[%s842 + $0x18] sm:$0xff]
    %847 = vmatprep.subr.mxu0 %v430
    %848 = vmatpush1.msra.mxu0 %v429
    %849 = vmatprep.subr.mxu0 %v434
    %850 = vmatpush1.msra.mxu0 %v433
    %851 = vmatprep.subr.mxu0 %v438
    %852 = vmatpush1.msra.mxu0 %v437
    %853 = vmatprep.subr.mxu0 %v442
    %854 = vmatpush1.msra.mxu0 %v441
    %855 = vmatprep.subr.mxu0 %v446
    %856 = vmatpush1.msra.mxu0 %v445
    %857 = vmatprep.subr.mxu0 %v450
    %858 = vmatpush1.msra.mxu0 %v449
    %859 = vmatprep.subr.mxu0 %v454
    %860 = vmatpush1.msra.mxu0 %v453
    %861 = vmatprep.subr.mxu0 %v458
    %862 = vmatpush1.msra.mxu0 %v457
    %863 = vmatprep.subr.mxu0 %v462
    %864 = vmatpush1.msra.mxu0 %v461
    %865 = vmatprep.subr.mxu0 %v466
    %866 = vmatpush1.msra.mxu0 %v465
    %867 = vmatprep.subr.mxu0 %v470
    %868 = vmatpush1.msra.mxu0 %v469
    %869 = vmatprep.subr.mxu0 %v474
    %870 = vmatpush1.msra.mxu0 %v473
    %871 = vmatprep.subr.mxu0 %v478
    %872 = vmatpush1.msra.mxu0 %v477
    %873 = vmatprep.subr.mxu0 %v482
    %874 = vmatpush1.msra.mxu0 %v481
    %875 = vmatprep.subr.mxu0 %v486
    %876 = vmatpush1.msra.mxu0 %v485
    %877 = vmatprep.subr.mxu0 %v490
    %878 = vmatpush1.msra.mxu0 %v489
    %879 = vmatprep.subr.mxu0 0.0
    %880 = vmatpush1.msra.mxu0 0.0
    %881 = vmatprep.subr.mxu0 0.0
    %882 = vmatpush1.msra.mxu0 0.0
    %883 = vmatprep.subr.mxu0 0.0
    %884 = vmatpush1.msra.mxu0 0.0
    %885 = vmatprep.subr.mxu0 0.0
    %886 = vmatpush1.msra.mxu0 0.0
    %887 = vmatprep.subr.mxu0 0.0
    %888 = vmatpush1.msra.mxu0 0.0
    %889 = vmatprep.subr.mxu0 0.0
    %890 = vmatpush1.msra.mxu0 0.0
    %891 = vmatprep.subr.mxu0 0.0
    %892 = vmatpush1.msra.mxu0 0.0
    %893 = vmatprep.subr.mxu0 0.0
    %894 = vmatpush1.msra.mxu0 0.0
    %895 = vmatprep.subr.mxu0 0.0
    %896 = vmatpush1.msra.mxu0 0.0
    %897 = vmatprep.subr.mxu0 0.0
    %898 = vmatpush1.msra.mxu0 0.0
    %899 = vmatprep.subr.mxu0 0.0
    %900 = vmatpush1.msra.mxu0 0.0
    %901 = vmatprep.subr.mxu0 0.0
    %902 = vmatpush1.msra.mxu0 0.0
    %903 = vmatprep.subr.mxu0 0.0
    %904 = vmatpush1.msra.mxu0 0.0
    %905 = vmatprep.subr.mxu0 0.0
    %906 = vmatpush1.msra.mxu0 0.0
    %907 = vmatprep.subr.mxu0 0.0
    %908 = vmatpush1.msra.mxu0 0.0
    %909 = vmatprep.subr.mxu0 0.0
    %910 = vmatpush1.msra.mxu0 0.0
    %911 = vmatprep.mubr.f32.mxu0 0.0
    %912 = vmatmul.mubr.f32.gmra.mrb[0].mxu0 %v839
    %v913 = vpop.f32.mrb[0].mxu0
    %v914 = vadd.f32 0.0, %v913
    %v915 = vpop.f32.mrb[0].mxu0
    %v916 = vadd.f32 0.0, %v915
    %917 = vdwg.mxu0
    %918 = vmatprep.subr.mxu0 %v432
    %919 = vmatpush1.msra.mxu0 %v431
    %920 = vmatprep.subr.mxu0 %v436
    %921 = vmatpush1.msra.mxu0 %v435
    %922 = vmatprep.subr.mxu0 %v440
    %923 = vmatpush1.msra.mxu0 %v439
    %924 = vmatprep.subr.mxu0 %v444
    %925 = vmatpush1.msra.mxu0 %v443
    %926 = vmatprep.subr.mxu0 %v448
    %927 = vmatpush1.msra.mxu0 %v447
    %928 = vmatprep.subr.mxu0 %v452
    %929 = vmatpush1.msra.mxu0 %v451
    %930 = vmatprep.subr.mxu0 %v456
    %931 = vmatpush1.msra.mxu0 %v455
    %932 = vmatprep.subr.mxu0 %v460
    %933 = vmatpush1.msra.mxu0 %v459
    %934 = vmatprep.subr.mxu0 %v464
    %935 = vmatpush1.msra.mxu0 %v463
    %936 = vmatprep.subr.mxu0 %v468
    %937 = vmatpush1.msra.mxu0 %v467
    %938 = vmatprep.subr.mxu0 %v472
    %939 = vmatpush1.msra.mxu0 %v471
    %940 = vmatprep.subr.mxu0 %v476
    %941 = vmatpush1.msra.mxu0 %v475
    %942 = vmatprep.subr.mxu0 %v480
    %943 = vmatpush1.msra.mxu0 %v479
    %944 = vmatprep.subr.mxu0 %v484
    %945 = vmatpush1.msra.mxu0 %v483
    %946 = vmatprep.subr.mxu0 %v488
    %947 = vmatpush1.msra.mxu0 %v487
    %948 = vmatprep.subr.mxu0 %v492
    %949 = vmatpush1.msra.mxu0 %v491
    %950 = vmatprep.subr.mxu0 0.0
    %951 = vmatpush1.msra.mxu0 0.0
    %952 = vmatprep.subr.mxu0 0.0
    %953 = vmatpush1.msra.mxu0 0.0
    %954 = vmatprep.subr.mxu0 0.0
    %955 = vmatpush1.msra.mxu0 0.0
    %956 = vmatprep.subr.mxu0 0.0
    %957 = vmatpush1.msra.mxu0 0.0
    %958 = vmatprep.subr.mxu0 0.0
    %959 = vmatpush1.msra.mxu0 0.0
    %960 = vmatprep.subr.mxu0 0.0
    %961 = vmatpush1.msra.mxu0 0.0
    %962 = vmatprep.subr.mxu0 0.0
    %963 = vmatpush1.msra.mxu0 0.0
    %964 = vmatprep.subr.mxu0 0.0
    %965 = vmatpush1.msra.mxu0 0.0
    %966 = vmatprep.subr.mxu0 0.0
    %967 = vmatpush1.msra.mxu0 0.0
    %968 = vmatprep.subr.mxu0 0.0
    %969 = vmatpush1.msra.mxu0 0.0
    %970 = vmatprep.subr.mxu0 0.0
    %971 = vmatpush1.msra.mxu0 0.0
    %972 = vmatprep.subr.mxu0 0.0
    %973 = vmatpush1.msra.mxu0 0.0
    %974 = vmatprep.subr.mxu0 0.0
    %975 = vmatpush1.msra.mxu0 0.0
    %976 = vmatprep.subr.mxu0 0.0
    %977 = vmatpush1.msra.mxu0 0.0
    %978 = vmatprep.subr.mxu0 0.0
    %979 = vmatpush1.msra.mxu0 0.0
    %980 = vmatprep.subr.mxu0 0.0
    %981 = vmatpush1.msra.mxu0 0.0
    %982 = vmatprep.mubr.f32.mxu0 0.0
    %983 = vmatmul.mubr.f32.gmra.mrb[0].mxu0 %v839
    %v984 = vpop.f32.mrb[0].mxu0
    %v985 = vadd.f32 0.0, %v984
    %v986 = vpop.f32.mrb[0].mxu0
    %v987 = vadd.f32 0.0, %v986
    %988 = vdwg.mxu0
    %v989 = vadd.f32 %v843, %v914
    %v990 = vadd.f32 %v844, %v916
    %v991 = vadd.f32 %v845, %v985
    %v992 = vadd.f32 %v846, %v987
    %v993 = vxor.u32 %v989, 2147483648
    %v994 = vmul.f32 %v993, 1.442695
    %v995 = vpow.pop %v994
    %v996 = vadd.f32 %v995, 1.0
    %v997 = vrcp.pop %v996
    %v998 = vmul.f32 1.0, %v997
    %v999 = vxor.u32 %v990, 2147483648
    %v1000 = vmul.f32 %v999, 1.442695
    %v1001 = vpow.pop %v1000
    %v1002 = vadd.f32 %v1001, 1.0
    %v1003 = vrcp.pop %v1002
    %v1004 = vmul.f32 1.0, %v1003
    %v1005 = vtanh.pop %v991
    %v1006 = vxor.u32 %v992, 2147483648
    %v1007 = vmul.f32 %v1006, 1.442695
    %v1008 = vpow.pop %v1007
    %v1009 = vadd.f32 %v1008, 1.0
    %v1010 = vrcp.pop %v1009
    %v1011 = vmul.f32 1.0, %v1010
    %v1012 = vmul.f32 %v1004, %v837
    %v1013 = vmul.f32 %v998, %v1005
    %v1014 = vadd.f32 %v1012, %v1013
    %v1015 = vtanh.pop %v1014
    %v1016 = vmul.f32 %v1011, %v1015
    %s1017 = smul.u32 3, 4
    %s1018 = smul.addr %s1017, 8
    %s1019 = scalar_lea.vmem [#allocation2], %s1018
    %v1020 = vld [vmem:[%s1019] sm:$0xff]
    %v1021 = vld [vmem:[%s1019 + $0x8] sm:$0xff]
    %v1022 = vld [vmem:[%s1019 + $0x10] sm:$0xff]
    %v1023 = vld [vmem:[%s1019 + $0x18] sm:$0xff]
    %1024 = vmatprep.subr.mxu0 %v430
    %1025 = vmatpush1.msra.mxu0 %v429
    %1026 = vmatprep.subr.mxu0 %v434
    %1027 = vmatpush1.msra.mxu0 %v433
    %1028 = vmatprep.subr.mxu0 %v438
    %1029 = vmatpush1.msra.mxu0 %v437
    %1030 = vmatprep.subr.mxu0 %v442
    %1031 = vmatpush1.msra.mxu0 %v441
    %1032 = vmatprep.subr.mxu0 %v446
    %1033 = vmatpush1.msra.mxu0 %v445
    %1034 = vmatprep.subr.mxu0 %v450
    %1035 = vmatpush1.msra.mxu0 %v449
    %1036 = vmatprep.subr.mxu0 %v454
    %1037 = vmatpush1.msra.mxu0 %v453
    %1038 = vmatprep.subr.mxu0 %v458
    %1039 = vmatpush1.msra.mxu0 %v457
    %1040 = vmatprep.subr.mxu0 %v462
    %1041 = vmatpush1.msra.mxu0 %v461
    %1042 = vmatprep.subr.mxu0 %v466
    %1043 = vmatpush1.msra.mxu0 %v465
    %1044 = vmatprep.subr.mxu0 %v470
    %1045 = vmatpush1.msra.mxu0 %v469
    %1046 = vmatprep.subr.mxu0 %v474
    %1047 = vmatpush1.msra.mxu0 %v473
    %1048 = vmatprep.subr.mxu0 %v478
    %1049 = vmatpush1.msra.mxu0 %v477
    %1050 = vmatprep.subr.mxu0 %v482
    %1051 = vmatpush1.msra.mxu0 %v481
    %1052 = vmatprep.subr.mxu0 %v486
    %1053 = vmatpush1.msra.mxu0 %v485
    %1054 = vmatprep.subr.mxu0 %v490
    %1055 = vmatpush1.msra.mxu0 %v489
    %1056 = vmatprep.subr.mxu0 0.0
    %1057 = vmatpush1.msra.mxu0 0.0
    %1058 = vmatprep.subr.mxu0 0.0
    %1059 = vmatpush1.msra.mxu0 0.0
    %1060 = vmatprep.subr.mxu0 0.0
    %1061 = vmatpush1.msra.mxu0 0.0
    %1062 = vmatprep.subr.mxu0 0.0
    %1063 = vmatpush1.msra.mxu0 0.0
    %1064 = vmatprep.subr.mxu0 0.0
    %1065 = vmatpush1.msra.mxu0 0.0
    %1066 = vmatprep.subr.mxu0 0.0
    %1067 = vmatpush1.msra.mxu0 0.0
    %1068 = vmatprep.subr.mxu0 0.0
    %1069 = vmatpush1.msra.mxu0 0.0
    %1070 = vmatprep.subr.mxu0 0.0
    %1071 = vmatpush1.msra.mxu0 0.0
    %1072 = vmatprep.subr.mxu0 0.0
    %1073 = vmatpush1.msra.mxu0 0.0
    %1074 = vmatprep.subr.mxu0 0.0
    %1075 = vmatpush1.msra.mxu0 0.0
    %1076 = vmatprep.subr.mxu0 0.0
    %1077 = vmatpush1.msra.mxu0 0.0
    %1078 = vmatprep.subr.mxu0 0.0
    %1079 = vmatpush1.msra.mxu0 0.0
    %1080 = vmatprep.subr.mxu0 0.0
    %1081 = vmatpush1.msra.mxu0 0.0
    %1082 = vmatprep.subr.mxu0 0.0
    %1083 = vmatpush1.msra.mxu0 0.0
    %1084 = vmatprep.subr.mxu0 0.0
    %1085 = vmatpush1.msra.mxu0 0.0
    %1086 = vmatprep.subr.mxu0 0.0
    %1087 = vmatpush1.msra.mxu0 0.0
    %1088 = vmatprep.mubr.f32.mxu0 0.0
    %1089 = vmatmul.mubr.f32.gmra.mrb[0].mxu0 %v1016
    %v1090 = vpop.f32.mrb[0].mxu0
    %v1091 = vadd.f32 0.0, %v1090
    %v1092 = vpop.f32.mrb[0].mxu0
    %v1093 = vadd.f32 0.0, %v1092
    %1094 = vdwg.mxu0
    %1095 = vmatprep.subr.mxu0 %v432
    %1096 = vmatpush1.msra.mxu0 %v431
    %1097 = vmatprep.subr.mxu0 %v436
    %1098 = vmatpush1.msra.mxu0 %v435
    %1099 = vmatprep.subr.mxu0 %v440
    %1100 = vmatpush1.msra.mxu0 %v439
    %1101 = vmatprep.subr.mxu0 %v444
    %1102 = vmatpush1.msra.mxu0 %v443
    %1103 = vmatprep.subr.mxu0 %v448
    %1104 = vmatpush1.msra.mxu0 %v447
    %1105 = vmatprep.subr.mxu0 %v452
    %1106 = vmatpush1.msra.mxu0 %v451
    %1107 = vmatprep.subr.mxu0 %v456
    %1108 = vmatpush1.msra.mxu0 %v455
    %1109 = vmatprep.subr.mxu0 %v460
    %1110 = vmatpush1.msra.mxu0 %v459
    %1111 = vmatprep.subr.mxu0 %v464
    %1112 = vmatpush1.msra.mxu0 %v463
    %1113 = vmatprep.subr.mxu0 %v468
    %1114 = vmatpush1.msra.mxu0 %v467
    %1115 = vmatprep.subr.mxu0 %v472
    %1116 = vmatpush1.msra.mxu0 %v471
    %1117 = vmatprep.subr.mxu0 %v476
    %1118 = vmatpush1.msra.mxu0 %v475
    %1119 = vmatprep.subr.mxu0 %v480
    %1120 = vmatpush1.msra.mxu0 %v479
    %1121 = vmatprep.subr.mxu0 %v484
    %1122 = vmatpush1.msra.mxu0 %v483
    %1123 = vmatprep.subr.mxu0 %v488
    %1124 = vmatpush1.msra.mxu0 %v487
    %1125 = vmatprep.subr.mxu0 %v492
    %1126 = vmatpush1.msra.mxu0 %v491
    %1127 = vmatprep.subr.mxu0 0.0
    %1128 = vmatpush1.msra.mxu0 0.0
    %1129 = vmatprep.subr.mxu0 0.0
    %1130 = vmatpush1.msra.mxu0 0.0
    %1131 = vmatprep.subr.mxu0 0.0
    %1132 = vmatpush1.msra.mxu0 0.0
    %1133 = vmatprep.subr.mxu0 0.0
    %1134 = vmatpush1.msra.mxu0 0.0
    %1135 = vmatprep.subr.mxu0 0.0
    %1136 = vmatpush1.msra.mxu0 0.0
    %1137 = vmatprep.subr.mxu0 0.0
    %1138 = vmatpush1.msra.mxu0 0.0
    %1139 = vmatprep.subr.mxu0 0.0
    %1140 = vmatpush1.msra.mxu0 0.0
    %1141 = vmatprep.subr.mxu0 0.0
    %1142 = vmatpush1.msra.mxu0 0.0
    %1143 = vmatprep.subr.mxu0 0.0
    %1144 = vmatpush1.msra.mxu0 0.0
    %1145 = vmatprep.subr.mxu0 0.0
    %1146 = vmatpush1.msra.mxu0 0.0
    %1147 = vmatprep.subr.mxu0 0.0
    %1148 = vmatpush1.msra.mxu0 0.0
    %1149 = vmatprep.subr.mxu0 0.0
    %1150 = vmatpush1.msra.mxu0 0.0
    %1151 = vmatprep.subr.mxu0 0.0
    %1152 = vmatpush1.msra.mxu0 0.0
    %1153 = vmatprep.subr.mxu0 0.0
    %1154 = vmatpush1.msra.mxu0 0.0
    %1155 = vmatprep.subr.mxu0 0.0
    %1156 = vmatpush1.msra.mxu0 0.0
    %1157 = vmatprep.subr.mxu0 0.0
    %1158 = vmatpush1.msra.mxu0 0.0
    %1159 = vmatprep.mubr.f32.mxu0 0.0
    %1160 = vmatmul.mubr.f32.gmra.mrb[0].mxu0 %v1016
    %v1161 = vpop.f32.mrb[0].mxu0
    %v1162 = vadd.f32 0.0, %v1161
    %v1163 = vpop.f32.mrb[0].mxu0
    %v1164 = vadd.f32 0.0, %v1163
    %1165 = vdwg.mxu0
    %v1166 = vadd.f32 %v1020, %v1091
    %v1167 = vadd.f32 %v1021, %v1093
    %v1168 = vadd.f32 %v1022, %v1162
    %v1169 = vadd.f32 %v1023, %v1164
    %v1170 = vxor.u32 %v1166, 2147483648
    %v1171 = vmul.f32 %v1170, 1.442695
    %v1172 = vpow.pop %v1171
    %v1173 = vadd.f32 %v1172, 1.0
    %v1174 = vrcp.pop %v1173
    %v1175 = vmul.f32 1.0, %v1174
    %v1176 = vxor.u32 %v1167, 2147483648
    %v1177 = vmul.f32 %v1176, 1.442695
    %v1178 = vpow.pop %v1177
    %v1179 = vadd.f32 %v1178, 1.0
    %v1180 = vrcp.pop %v1179
    %v1181 = vmul.f32 1.0, %v1180
    %v1182 = vtanh.pop %v1168
    %v1183 = vxor.u32 %v1169, 2147483648
    %v1184 = vmul.f32 %v1183, 1.442695
    %v1185 = vpow.pop %v1184
    %v1186 = vadd.f32 %v1185, 1.0
    %v1187 = vrcp.pop %v1186
    %v1188 = vmul.f32 1.0, %v1187
    %v1189 = vmul.f32 %v1181, %v1014
    %v1190 = vmul.f32 %v1175, %v1182
    %v1191 = vadd.f32 %v1189, %v1190
    %v1192 = vtanh.pop %v1191
    %v1193 = vmul.f32 %v1188, %v1192
    %s1194 = smul.u32 4, 4
    %s1195 = smul.addr %s1194, 8
    %s1196 = scalar_lea.vmem [#allocation2], %s1195
    %v1197 = vld [vmem:[%s1196] sm:$0xff]
    %v1198 = vld [vmem:[%s1196 + $0x8] sm:$0xff]
    %v1199 = vld [vmem:[%s1196 + $0x10] sm:$0xff]
    %v1200 = vld [vmem:[%s1196 + $0x18] sm:$0xff]
    %1201 = vmatprep.subr.mxu0 %v430
    %1202 = vmatpush1.msra.mxu0 %v429
    %1203 = vmatprep.subr.mxu0 %v434
    %1204 = vmatpush1.msra.mxu0 %v433
    %1205 = vmatprep.subr.mxu0 %v438
    %1206 = vmatpush1.msra.mxu0 %v437
    %1207 = vmatprep.subr.mxu0 %v442
    %1208 = vmatpush1.msra.mxu0 %v441
    %1209 = vmatprep.subr.mxu0 %v446
    %1210 = vmatpush1.msra.mxu0 %v445
    %1211 = vmatprep.subr.mxu0 %v450
    %1212 = vmatpush1.msra.mxu0 %v449
    %1213 = vmatprep.subr.mxu0 %v454
    %1214 = vmatpush1.msra.mxu0 %v453
    %1215 = vmatprep.subr.mxu0 %v458
    %1216 = vmatpush1.msra.mxu0 %v457
    %1217 = vmatprep.subr.mxu0 %v462
    %1218 = vmatpush1.msra.mxu0 %v461
    %1219 = vmatprep.subr.mxu0 %v466
    %1220 = vmatpush1.msra.mxu0 %v465
    %1221 = vmatprep.subr.mxu0 %v470
    %1222 = vmatpush1.msra.mxu0 %v469
    %1223 = vmatprep.subr.mxu0 %v474
    %1224 = vmatpush1.msra.mxu0 %v473
    %1225 = vmatprep.subr.mxu0 %v478
    %1226 = vmatpush1.msra.mxu0 %v477
    %1227 = vmatprep.subr.mxu0 %v482
    %1228 = vmatpush1.msra.mxu0 %v481
    %1229 = vmatprep.subr.mxu0 %v486
    %1230 = vmatpush1.msra.mxu0 %v485
    %1231 = vmatprep.subr.mxu0 %v490
    %1232 = vmatpush1.msra.mxu0 %v489
    %1233 = vmatprep.subr.mxu0 0.0
    %1234 = vmatpush1.msra.mxu0 0.0
    %1235 = vmatprep.subr.mxu0 0.0
    %1236 = vmatpush1.msra.mxu0 0.0
    %1237 = vmatprep.subr.mxu0 0.0
    %1238 = vmatpush1.msra.mxu0 0.0
    %1239 = vmatprep.subr.mxu0 0.0
    %1240 = vmatpush1.msra.mxu0 0.0
    %1241 = vmatprep.subr.mxu0 0.0
    %1242 = vmatpush1.msra.mxu0 0.0
    %1243 = vmatprep.subr.mxu0 0.0
    %1244 = vmatpush1.msra.mxu0 0.0
    %1245 = vmatprep.subr.mxu0 0.0
    %1246 = vmatpush1.msra.mxu0 0.0
    %1247 = vmatprep.subr.mxu0 0.0
    %1248 = vmatpush1.msra.mxu0 0.0
    %1249 = vmatprep.subr.mxu0 0.0
    %1250 = vmatpush1.msra.mxu0 0.0
    %1251 = vmatprep.subr.mxu0 0.0
    %1252 = vmatpush1.msra.mxu0 0.0
    %1253 = vmatprep.subr.mxu0 0.0
    %1254 = vmatpush1.msra.mxu0 0.0
    %1255 = vmatprep.subr.mxu0 0.0
    %1256 = vmatpush1.msra.mxu0 0.0
    %1257 = vmatprep.subr.mxu0 0.0
    %1258 = vmatpush1.msra.mxu0 0.0
    %1259 = vmatprep.subr.mxu0 0.0
    %1260 = vmatpush1.msra.mxu0 0.0
    %1261 = vmatprep.subr.mxu0 0.0
    %1262 = vmatpush1.msra.mxu0 0.0
    %1263 = vmatprep.subr.mxu0 0.0
    %1264 = vmatpush1.msra.mxu0 0.0
    %1265 = vmatprep.mubr.f32.mxu0 0.0
    %1266 = vmatmul.mubr.f32.gmra.mrb[0].mxu0 %v1193
    %v1267 = vpop.f32.mrb[0].mxu0
    %v1268 = vadd.f32 0.0, %v1267
    %v1269 = vpop.f32.mrb[0].mxu0
    %v1270 = vadd.f32 0.0, %v1269
    %1271 = vdwg.mxu0
    %1272 = vmatprep.subr.mxu0 %v432
    %1273 = vmatpush1.msra.mxu0 %v431
    %1274 = vmatprep.subr.mxu0 %v436
    %1275 = vmatpush1.msra.mxu0 %v435
    %1276 = vmatprep.subr.mxu0 %v440
    %1277 = vmatpush1.msra.mxu0 %v439
    %1278 = vmatprep.subr.mxu0 %v444
    %1279 = vmatpush1.msra.mxu0 %v443
    %1280 = vmatprep.subr.mxu0 %v448
    %1281 = vmatpush1.msra.mxu0 %v447
    %1282 = vmatprep.subr.mxu0 %v452
    %1283 = vmatpush1.msra.mxu0 %v451
    %1284 = vmatprep.subr.mxu0 %v456
    %1285 = vmatpush1.msra.mxu0 %v455
    %1286 = vmatprep.subr.mxu0 %v460
    %1287 = vmatpush1.msra.mxu0 %v459
    %1288 = vmatprep.subr.mxu0 %v464
    %1289 = vmatpush1.msra.mxu0 %v463
    %1290 = vmatprep.subr.mxu0 %v468
    %1291 = vmatpush1.msra.mxu0 %v467
    %1292 = vmatprep.subr.mxu0 %v472
    %1293 = vmatpush1.msra.mxu0 %v471
    %1294 = vmatprep.subr.mxu0 %v476
    %1295 = vmatpush1.msra.mxu0 %v475
    %1296 = vmatprep.subr.mxu0 %v480
    %1297 = vmatpush1.msra.mxu0 %v479
    %1298 = vmatprep.subr.mxu0 %v484
    %1299 = vmatpush1.msra.mxu0 %v483
    %1300 = vmatprep.subr.mxu0 %v488
    %1301 = vmatpush1.msra.mxu0 %v487
    %1302 = vmatprep.subr.mxu0 %v492
    %1303 = vmatpush1.msra.mxu0 %v491
    %1304 = vmatprep.subr.mxu0 0.0
    %1305 = vmatpush1.msra.mxu0 0.0
    %1306 = vmatprep.subr.mxu0 0.0
    %1307 = vmatpush1.msra.mxu0 0.0
    %1308 = vmatprep.subr.mxu0 0.0
    %1309 = vmatpush1.msra.mxu0 0.0
    %1310 = vmatprep.subr.mxu0 0.0
    %1311 = vmatpush1.msra.mxu0 0.0
    %1312 = vmatprep.subr.mxu0 0.0
    %1313 = vmatpush1.msra.mxu0 0.0
    %1314 = vmatprep.subr.mxu0 0.0
    %1315 = vmatpush1.msra.mxu0 0.0
    %1316 = vmatprep.subr.mxu0 0.0
    %1317 = vmatpush1.msra.mxu0 0.0
    %1318 = vmatprep.subr.mxu0 0.0
    %1319 = vmatpush1.msra.mxu0 0.0
    %1320 = vmatprep.subr.mxu0 0.0
    %1321 = vmatpush1.msra.mxu0 0.0
    %1322 = vmatprep.subr.mxu0 0.0
    %1323 = vmatpush1.msra.mxu0 0.0
    %1324 = vmatprep.subr.mxu0 0.0
    %1325 = vmatpush1.msra.mxu0 0.0
    %1326 = vmatprep.subr.mxu0 0.0
    %1327 = vmatpush1.msra.mxu0 0.0
    %1328 = vmatprep.subr.mxu0 0.0
    %1329 = vmatpush1.msra.mxu0 0.0
    %1330 = vmatprep.subr.mxu0 0.0
    %1331 = vmatpush1.msra.mxu0 0.0
    %1332 = vmatprep.subr.mxu0 0.0
    %1333 = vmatpush1.msra.mxu0 0.0
    %1334 = vmatprep.subr.mxu0 0.0
    %1335 = vmatpush1.msra.mxu0 0.0
    %1336 = vmatprep.mubr.f32.mxu0 0.0
    %1337 = vmatmul.mubr.f32.gmra.mrb[0].mxu0 %v1193
    %v1338 = vpop.f32.mrb[0].mxu0
    %v1339 = vadd.f32 0.0, %v1338
    %v1340 = vpop.f32.mrb[0].mxu0
    %v1341 = vadd.f32 0.0, %v1340
    %1342 = vdwg.mxu0
    %v1343 = vadd.f32 %v1197, %v1268
    %v1344 = vadd.f32 %v1198, %v1270
    %v1345 = vadd.f32 %v1199, %v1339
    %v1346 = vadd.f32 %v1200, %v1341
    %v1347 = vxor.u32 %v1343, 2147483648
    %v1348 = vmul.f32 %v1347, 1.442695
    %v1349 = vpow.pop %v1348
    %v1350 = vadd.f32 %v1349, 1.0
    %v1351 = vrcp.pop %v1350
    %v1352 = vmul.f32 1.0, %v1351
    %v1353 = vxor.u32 %v1344, 2147483648
    %v1354 = vmul.f32 %v1353, 1.442695
    %v1355 = vpow.pop %v1354
    %v1356 = vadd.f32 %v1355, 1.0
    %v1357 = vrcp.pop %v1356
    %v1358 = vmul.f32 1.0, %v1357
    %v1359 = vtanh.pop %v1345
    %v1360 = vxor.u32 %v1346, 2147483648
    %v1361 = vmul.f32 %v1360, 1.442695
    %v1362 = vpow.pop %v1361
    %v1363 = vadd.f32 %v1362, 1.0
    %v1364 = vrcp.pop %v1363
    %v1365 = vmul.f32 1.0, %v1364
    %v1366 = vmul.f32 %v1358, %v1191
    %v1367 = vmul.f32 %v1352, %v1359
    %v1368 = vadd.f32 %v1366, %v1367
    %v1369 = vtanh.pop %v1368
    %v1370 = vmul.f32 %v1365, %v1369
    %s1371 = smul.u32 5, 4
    %s1372 = smul.addr %s1371, 8
    %s1373 = scalar_lea.vmem [#allocation2], %s1372
    %v1374 = vld [vmem:[%s1373] sm:$0xff]
    %v1375 = vld [vmem:[%s1373 + $0x8] sm:$0xff]
    %v1376 = vld [vmem:[%s1373 + $0x10] sm:$0xff]
    %v1377 = vld [vmem:[%s1373 + $0x18] sm:$0xff]
    %1378 = vmatprep.subr.mxu0 %v430
    %1379 = vmatpush1.msra.mxu0 %v429
    %1380 = vmatprep.subr.mxu0 %v434
    %1381 = vmatpush1.msra.mxu0 %v433
    %1382 = vmatprep.subr.mxu0 %v438
    %1383 = vmatpush1.msra.mxu0 %v437
    %1384 = vmatprep.subr.mxu0 %v442
    %1385 = vmatpush1.msra.mxu0 %v441
    %1386 = vmatprep.subr.mxu0 %v446
    %1387 = vmatpush1.msra.mxu0 %v445
    %1388 = vmatprep.subr.mxu0 %v450
    %1389 = vmatpush1.msra.mxu0 %v449
    %1390 = vmatprep.subr.mxu0 %v454
    %1391 = vmatpush1.msra.mxu0 %v453
    %1392 = vmatprep.subr.mxu0 %v458
    %1393 = vmatpush1.msra.mxu0 %v457
    %1394 = vmatprep.subr.mxu0 %v462
    %1395 = vmatpush1.msra.mxu0 %v461
    %1396 = vmatprep.subr.mxu0 %v466
    %1397 = vmatpush1.msra.mxu0 %v465
    %1398 = vmatprep.subr.mxu0 %v470
    %1399 = vmatpush1.msra.mxu0 %v469
    %1400 = vmatprep.subr.mxu0 %v474
    %1401 = vmatpush1.msra.mxu0 %v473
    %1402 = vmatprep.subr.mxu0 %v478
    %1403 = vmatpush1.msra.mxu0 %v477
    %1404 = vmatprep.subr.mxu0 %v482
    %1405 = vmatpush1.msra.mxu0 %v481
    %1406 = vmatprep.subr.mxu0 %v486
    %1407 = vmatpush1.msra.mxu0 %v485
    %1408 = vmatprep.subr.mxu0 %v490
    %1409 = vmatpush1.msra.mxu0 %v489
    %1410 = vmatprep.subr.mxu0 0.0
    %1411 = vmatpush1.msra.mxu0 0.0
    %1412 = vmatprep.subr.mxu0 0.0
    %1413 = vmatpush1.msra.mxu0 0.0
    %1414 = vmatprep.subr.mxu0 0.0
    %1415 = vmatpush1.msra.mxu0 0.0
    %1416 = vmatprep.subr.mxu0 0.0
    %1417 = vmatpush1.msra.mxu0 0.0
    %1418 = vmatprep.subr.mxu0 0.0
    %1419 = vmatpush1.msra.mxu0 0.0
    %1420 = vmatprep.subr.mxu0 0.0
    %1421 = vmatpush1.msra.mxu0 0.0
    %1422 = vmatprep.subr.mxu0 0.0
    %1423 = vmatpush1.msra.mxu0 0.0
    %1424 = vmatprep.subr.mxu0 0.0
    %1425 = vmatpush1.msra.mxu0 0.0
    %1426 = vmatprep.subr.mxu0 0.0
    %1427 = vmatpush1.msra.mxu0 0.0
    %1428 = vmatprep.subr.mxu0 0.0
    %1429 = vmatpush1.msra.mxu0 0.0
    %1430 = vmatprep.subr.mxu0 0.0
    %1431 = vmatpush1.msra.mxu0 0.0
    %1432 = vmatprep.subr.mxu0 0.0
    %1433 = vmatpush1.msra.mxu0 0.0
    %1434 = vmatprep.subr.mxu0 0.0
    %1435 = vmatpush1.msra.mxu0 0.0
    %1436 = vmatprep.subr.mxu0 0.0
    %1437 = vmatpush1.msra.mxu0 0.0
    %1438 = vmatprep.subr.mxu0 0.0
    %1439 = vmatpush1.msra.mxu0 0.0
    %1440 = vmatprep.subr.mxu0 0.0
    %1441 = vmatpush1.msra.mxu0 0.0
    %1442 = vmatprep.mubr.f32.mxu0 0.0
    %1443 = vmatmul.mubr.f32.gmra.mrb[0].mxu0 %v1370
    %v1444 = vpop.f32.mrb[0].mxu0
    %v1445 = vadd.f32 0.0, %v1444
    %v1446 = vpop.f32.mrb[0].mxu0
    %v1447 = vadd.f32 0.0, %v1446
    %1448 = vdwg.mxu0
    %1449 = vmatprep.subr.mxu0 %v432
    %1450 = vmatpush1.msra.mxu0 %v431
    %1451 = vmatprep.subr.mxu0 %v436
    %1452 = vmatpush1.msra.mxu0 %v435
    %1453 = vmatprep.subr.mxu0 %v440
    %1454 = vmatpush1.msra.mxu0 %v439
    %1455 = vmatprep.subr.mxu0 %v444
    %1456 = vmatpush1.msra.mxu0 %v443
    %1457 = vmatprep.subr.mxu0 %v448
    %1458 = vmatpush1.msra.mxu0 %v447
    %1459 = vmatprep.subr.mxu0 %v452
    %1460 = vmatpush1.msra.mxu0 %v451
    %1461 = vmatprep.subr.mxu0 %v456
    %1462 = vmatpush1.msra.mxu0 %v455
    %1463 = vmatprep.subr.mxu0 %v460
    %1464 = vmatpush1.msra.mxu0 %v459
    %1465 = vmatprep.subr.mxu0 %v464
    %1466 = vmatpush1.msra.mxu0 %v463
    %1467 = vmatprep.subr.mxu0 %v468
    %1468 = vmatpush1.msra.mxu0 %v467
    %1469 = vmatprep.subr.mxu0 %v472
    %1470 = vmatpush1.msra.mxu0 %v471
    %1471 = vmatprep.subr.mxu0 %v476
    %1472 = vmatpush1.msra.mxu0 %v475
    %1473 = vmatprep.subr.mxu0 %v480
    %1474 = vmatpush1.msra.mxu0 %v479
    %1475 = vmatprep.subr.mxu0 %v484
    %1476 = vmatpush1.msra.mxu0 %v483
    %1477 = vmatprep.subr.mxu0 %v488
    %1478 = vmatpush1.msra.mxu0 %v487
    %1479 = vmatprep.subr.mxu0 %v492
    %1480 = vmatpush1.msra.mxu0 %v491
    %1481 = vmatprep.subr.mxu0 0.0
    %1482 = vmatpush1.msra.mxu0 0.0
    %1483 = vmatprep.subr.mxu0 0.0
    %1484 = vmatpush1.msra.mxu0 0.0
    %1485 = vmatprep.subr.mxu0 0.0
    %1486 = vmatpush1.msra.mxu0 0.0
    %1487 = vmatprep.subr.mxu0 0.0
    %1488 = vmatpush1.msra.mxu0 0.0
    %1489 = vmatprep.subr.mxu0 0.0
    %1490 = vmatpush1.msra.mxu0 0.0
    %1491 = vmatprep.subr.mxu0 0.0
    %1492 = vmatpush1.msra.mxu0 0.0
    %1493 = vmatprep.subr.mxu0 0.0
    %1494 = vmatpush1.msra.mxu0 0.0
    %1495 = vmatprep.subr.mxu0 0.0
    %1496 = vmatpush1.msra.mxu0 0.0
    %1497 = vmatprep.subr.mxu0 0.0
    %1498 = vmatpush1.msra.mxu0 0.0
    %1499 = vmatprep.subr.mxu0 0.0
    %1500 = vmatpush1.msra.mxu0 0.0
    %1501 = vmatprep.subr.mxu0 0.0
    %1502 = vmatpush1.msra.mxu0 0.0
    %1503 = vmatprep.subr.mxu0 0.0
    %1504 = vmatpush1.msra.mxu0 0.0
    %1505 = vmatprep.subr.mxu0 0.0
    %1506 = vmatpush1.msra.mxu0 0.0
    %1507 = vmatprep.subr.mxu0 0.0
    %1508 = vmatpush1.msra.mxu0 0.0
    %1509 = vmatprep.subr.mxu0 0.0
    %1510 = vmatpush1.msra.mxu0 0.0
    %1511 = vmatprep.subr.mxu0 0.0
    %1512 = vmatpush1.msra.mxu0 0.0
    %1513 = vmatprep.mubr.f32.mxu0 0.0
    %1514 = vmatmul.mubr.f32.gmra.mrb[0].mxu0 %v1370
    %v1515 = vpop.f32.mrb[0].mxu0
    %v1516 = vadd.f32 0.0, %v1515
    %v1517 = vpop.f32.mrb[0].mxu0
    %v1518 = vadd.f32 0.0, %v1517
    %1519 = vdwg.mxu0
    %v1520 = vadd.f32 %v1374, %v1445
    %v1521 = vadd.f32 %v1375, %v1447
    %v1522 = vadd.f32 %v1376, %v1516
    %v1523 = vadd.f32 %v1377, %v1518
    %v1524 = vxor.u32 %v1520, 2147483648
    %v1525 = vmul.f32 %v1524, 1.442695
    %v1526 = vpow.pop %v1525
    %v1527 = vadd.f32 %v1526, 1.0
    %v1528 = vrcp.pop %v1527
    %v1529 = vmul.f32 1.0, %v1528
    %v1530 = vxor.u32 %v1521, 2147483648
    %v1531 = vmul.f32 %v1530, 1.442695
    %v1532 = vpow.pop %v1531
    %v1533 = vadd.f32 %v1532, 1.0
    %v1534 = vrcp.pop %v1533
    %v1535 = vmul.f32 1.0, %v1534
    %v1536 = vtanh.pop %v1522
    %v1537 = vxor.u32 %v1523, 2147483648
    %v1538 = vmul.f32 %v1537, 1.442695
    %v1539 = vpow.pop %v1538
    %v1540 = vadd.f32 %v1539, 1.0
    %v1541 = vrcp.pop %v1540
    %v1542 = vmul.f32 1.0, %v1541
    %v1543 = vmul.f32 %v1535, %v1368
    %v1544 = vmul.f32 %v1529, %v1536
    %v1545 = vadd.f32 %v1543, %v1544
    %v1546 = vtanh.pop %v1545
    %v1547 = vmul.f32 %v1542, %v1546
    %s1548 = smul.u32 6, 4
    %s1549 = smul.addr %s1548, 8
    %s1550 = scalar_lea.vmem [#allocation2], %s1549
    %v1551 = vld [vmem:[%s1550] sm:$0xff]
    %v1552 = vld [vmem:[%s1550 + $0x8] sm:$0xff]
    %v1553 = vld [vmem:[%s1550 + $0x10] sm:$0xff]
    %v1554 = vld [vmem:[%s1550 + $0x18] sm:$0xff]
    %1555 = vmatprep.subr.mxu0 %v430
    %1556 = vmatpush1.msra.mxu0 %v429
    %1557 = vmatprep.subr.mxu0 %v434
    %1558 = vmatpush1.msra.mxu0 %v433
    %1559 = vmatprep.subr.mxu0 %v438
    %1560 = vmatpush1.msra.mxu0 %v437
    %1561 = vmatprep.subr.mxu0 %v442
    %1562 = vmatpush1.msra.mxu0 %v441
    %1563 = vmatprep.subr.mxu0 %v446
    %1564 = vmatpush1.msra.mxu0 %v445
    %1565 = vmatprep.subr.mxu0 %v450
    %1566 = vmatpush1.msra.mxu0 %v449
    %1567 = vmatprep.subr.mxu0 %v454
    %1568 = vmatpush1.msra.mxu0 %v453
    %1569 = vmatprep.subr.mxu0 %v458
    %1570 = vmatpush1.msra.mxu0 %v457
    %1571 = vmatprep.subr.mxu0 %v462
    %1572 = vmatpush1.msra.mxu0 %v461
    %1573 = vmatprep.subr.mxu0 %v466
    %1574 = vmatpush1.msra.mxu0 %v465
    %1575 = vmatprep.subr.mxu0 %v470
    %1576 = vmatpush1.msra.mxu0 %v469
    %1577 = vmatprep.subr.mxu0 %v474
    %1578 = vmatpush1.msra.mxu0 %v473
    %1579 = vmatprep.subr.mxu0 %v478
    %1580 = vmatpush1.msra.mxu0 %v477
    %1581 = vmatprep.subr.mxu0 %v482
    %1582 = vmatpush1.msra.mxu0 %v481
    %1583 = vmatprep.subr.mxu0 %v486
    %1584 = vmatpush1.msra.mxu0 %v485
    %1585 = vmatprep.subr.mxu0 %v490
    %1586 = vmatpush1.msra.mxu0 %v489
    %1587 = vmatprep.subr.mxu0 0.0
    %1588 = vmatpush1.msra.mxu0 0.0
    %1589 = vmatprep.subr.mxu0 0.0
    %1590 = vmatpush1.msra.mxu0 0.0
    %1591 = vmatprep.subr.mxu0 0.0
    %1592 = vmatpush1.msra.mxu0 0.0
    %1593 = vmatprep.subr.mxu0 0.0
    %1594 = vmatpush1.msra.mxu0 0.0
    %1595 = vmatprep.subr.mxu0 0.0
    %1596 = vmatpush1.msra.mxu0 0.0
    %1597 = vmatprep.subr.mxu0 0.0
    %1598 = vmatpush1.msra.mxu0 0.0
    %1599 = vmatprep.subr.mxu0 0.0
    %1600 = vmatpush1.msra.mxu0 0.0
    %1601 = vmatprep.subr.mxu0 0.0
    %1602 = vmatpush1.msra.mxu0 0.0
    %1603 = vmatprep.subr.mxu0 0.0
    %1604 = vmatpush1.msra.mxu0 0.0
    %1605 = vmatprep.subr.mxu0 0.0
    %1606 = vmatpush1.msra.mxu0 0.0
    %1607 = vmatprep.subr.mxu0 0.0
    %1608 = vmatpush1.msra.mxu0 0.0
    %1609 = vmatprep.subr.mxu0 0.0
    %1610 = vmatpush1.msra.mxu0 0.0
    %1611 = vmatprep.subr.mxu0 0.0
    %1612 = vmatpush1.msra.mxu0 0.0
    %1613 = vmatprep.subr.mxu0 0.0
    %1614 = vmatpush1.msra.mxu0 0.0
    %1615 = vmatprep.subr.mxu0 0.0
    %1616 = vmatpush1.msra.mxu0 0.0
    %1617 = vmatprep.subr.mxu0 0.0
    %1618 = vmatpush1.msra.mxu0 0.0
    %1619 = vmatprep.mubr.f32.mxu0 0.0
    %1620 = vmatmul.mubr.f32.gmra.mrb[0].mxu0 %v1547
    %v1621 = vpop.f32.mrb[0].mxu0
    %v1622 = vadd.f32 0.0, %v1621
    %v1623 = vpop.f32.mrb[0].mxu0
    %v1624 = vadd.f32 0.0, %v1623
    %1625 = vdwg.mxu0
    %1626 = vmatprep.subr.mxu0 %v432
    %1627 = vmatpush1.msra.mxu0 %v431
    %1628 = vmatprep.subr.mxu0 %v436
    %1629 = vmatpush1.msra.mxu0 %v435
    %1630 = vmatprep.subr.mxu0 %v440
    %1631 = vmatpush1.msra.mxu0 %v439
    %1632 = vmatprep.subr.mxu0 %v444
    %1633 = vmatpush1.msra.mxu0 %v443
    %1634 = vmatprep.subr.mxu0 %v448
    %1635 = vmatpush1.msra.mxu0 %v447
    %1636 = vmatprep.subr.mxu0 %v452
    %1637 = vmatpush1.msra.mxu0 %v451
    %1638 = vmatprep.subr.mxu0 %v456
    %1639 = vmatpush1.msra.mxu0 %v455
    %1640 = vmatprep.subr.mxu0 %v460
    %1641 = vmatpush1.msra.mxu0 %v459
    %1642 = vmatprep.subr.mxu0 %v464
    %1643 = vmatpush1.msra.mxu0 %v463
    %1644 = vmatprep.subr.mxu0 %v468
    %1645 = vmatpush1.msra.mxu0 %v467
    %1646 = vmatprep.subr.mxu0 %v472
    %1647 = vmatpush1.msra.mxu0 %v471
    %1648 = vmatprep.subr.mxu0 %v476
    %1649 = vmatpush1.msra.mxu0 %v475
    %1650 = vmatprep.subr.mxu0 %v480
    %1651 = vmatpush1.msra.mxu0 %v479
    %1652 = vmatprep.subr.mxu0 %v484
    %1653 = vmatpush1.msra.mxu0 %v483
    %1654 = vmatprep.subr.mxu0 %v488
    %1655 = vmatpush1.msra.mxu0 %v487
    %1656 = vmatprep.subr.mxu0 %v492
    %1657 = vmatpush1.msra.mxu0 %v491
    %1658 = vmatprep.subr.mxu0 0.0
    %1659 = vmatpush1.msra.mxu0 0.0
    %1660 = vmatprep.subr.mxu0 0.0
    %1661 = vmatpush1.msra.mxu0 0.0
    %1662 = vmatprep.subr.mxu0 0.0
    %1663 = vmatpush1.msra.mxu0 0.0
    %1664 = vmatprep.subr.mxu0 0.0
    %1665 = vmatpush1.msra.mxu0 0.0
    %1666 = vmatprep.subr.mxu0 0.0
    %1667 = vmatpush1.msra.mxu0 0.0
    %1668 = vmatprep.subr.mxu0 0.0
    %1669 = vmatpush1.msra.mxu0 0.0
    %1670 = vmatprep.subr.mxu0 0.0
    %1671 = vmatpush1.msra.mxu0 0.0
    %1672 = vmatprep.subr.mxu0 0.0
    %1673 = vmatpush1.msra.mxu0 0.0
    %1674 = vmatprep.subr.mxu0 0.0
    %1675 = vmatpush1.msra.mxu0 0.0
    %1676 = vmatprep.subr.mxu0 0.0
    %1677 = vmatpush1.msra.mxu0 0.0
    %1678 = vmatprep.subr.mxu0 0.0
    %1679 = vmatpush1.msra.mxu0 0.0
    %1680 = vmatprep.subr.mxu0 0.0
    %1681 = vmatpush1.msra.mxu0 0.0
    %1682 = vmatprep.subr.mxu0 0.0
    %1683 = vmatpush1.msra.mxu0 0.0
    %1684 = vmatprep.subr.mxu0 0.0
    %1685 = vmatpush1.msra.mxu0 0.0
    %1686 = vmatprep.subr.mxu0 0.0
    %1687 = vmatpush1.msra.mxu0 0.0
    %1688 = vmatprep.subr.mxu0 0.0
    %1689 = vmatpush1.msra.mxu0 0.0
    %1690 = vmatprep.mubr.f32.mxu0 0.0
    %1691 = vmatmul.mubr.f32.gmra.mrb[0].mxu0 %v1547
    %v1692 = vpop.f32.mrb[0].mxu0
    %v1693 = vadd.f32 0.0, %v1692
    %v1694 = vpop.f32.mrb[0].mxu0
    %v1695 = vadd.f32 0.0, %v1694
    %1696 = vdwg.mxu0
    %v1697 = vadd.f32 %v1551, %v1622
    %v1698 = vadd.f32 %v1552, %v1624
    %v1699 = vadd.f32 %v1553, %v1693
    %v1700 = vadd.f32 %v1554, %v1695
    %v1701 = vxor.u32 %v1697, 2147483648
    %v1702 = vmul.f32 %v1701, 1.442695
    %v1703 = vpow.pop %v1702
    %v1704 = vadd.f32 %v1703, 1.0
    %v1705 = vrcp.pop %v1704
    %v1706 = vmul.f32 1.0, %v1705
    %v1707 = vxor.u32 %v1698, 2147483648
    %v1708 = vmul.f32 %v1707, 1.442695
    %v1709 = vpow.pop %v1708
    %v1710 = vadd.f32 %v1709, 1.0
    %v1711 = vrcp.pop %v1710
    %v1712 = vmul.f32 1.0, %v1711
    %v1713 = vtanh.pop %v1699
    %v1714 = vxor.u32 %v1700, 2147483648
    %v1715 = vmul.f32 %v1714, 1.442695
    %v1716 = vpow.pop %v1715
    %v1717 = vadd.f32 %v1716, 1.0
    %v1718 = vrcp.pop %v1717
    %v1719 = vmul.f32 1.0, %v1718
    %v1720 = vmul.f32 %v1712, %v1545
    %v1721 = vmul.f32 %v1706, %v1713
    %v1722 = vadd.f32 %v1720, %v1721
    %v1723 = vtanh.pop %v1722
    %v1724 = vmul.f32 %v1719, %v1723
    %s1725 = smul.u32 7, 4
    %s1726 = smul.addr %s1725, 8
    %s1727 = scalar_lea.vmem [#allocation2], %s1726
    %v1728 = vld [vmem:[%s1727] sm:$0xff]
    %v1729 = vld [vmem:[%s1727 + $0x8] sm:$0xff]
    %v1730 = vld [vmem:[%s1727 + $0x10] sm:$0xff]
    %v1731 = vld [vmem:[%s1727 + $0x18] sm:$0xff]
    %1732 = vmatprep.subr.mxu0 %v430
    %1733 = vmatpush1.msra.mxu0 %v429
    %1734 = vmatprep.subr.mxu0 %v434
    %1735 = vmatpush1.msra.mxu0 %v433
    %1736 = vmatprep.subr.mxu0 %v438
    %1737 = vmatpush1.msra.mxu0 %v437
    %1738 = vmatprep.subr.mxu0 %v442
    %1739 = vmatpush1.msra.mxu0 %v441
    %1740 = vmatprep.subr.mxu0 %v446
    %1741 = vmatpush1.msra.mxu0 %v445
    %1742 = vmatprep.subr.mxu0 %v450
    %1743 = vmatpush1.msra.mxu0 %v449
    %1744 = vmatprep.subr.mxu0 %v454
    %1745 = vmatpush1.msra.mxu0 %v453
    %1746 = vmatprep.subr.mxu0 %v458
    %1747 = vmatpush1.msra.mxu0 %v457
    %1748 = vmatprep.subr.mxu0 %v462
    %1749 = vmatpush1.msra.mxu0 %v461
    %1750 = vmatprep.subr.mxu0 %v466
    %1751 = vmatpush1.msra.mxu0 %v465
    %1752 = vmatprep.subr.mxu0 %v470
    %1753 = vmatpush1.msra.mxu0 %v469
    %1754 = vmatprep.subr.mxu0 %v474
    %1755 = vmatpush1.msra.mxu0 %v473
    %1756 = vmatprep.subr.mxu0 %v478
    %1757 = vmatpush1.msra.mxu0 %v477
    %1758 = vmatprep.subr.mxu0 %v482
    %1759 = vmatpush1.msra.mxu0 %v481
    %1760 = vmatprep.subr.mxu0 %v486
    %1761 = vmatpush1.msra.mxu0 %v485
    %1762 = vmatprep.subr.mxu0 %v490
    %1763 = vmatpush1.msra.mxu0 %v489
    %1764 = vmatprep.subr.mxu0 0.0
    %1765 = vmatpush1.msra.mxu0 0.0
    %1766 = vmatprep.subr.mxu0 0.0
    %1767 = vmatpush1.msra.mxu0 0.0
    %1768 = vmatprep.subr.mxu0 0.0
    %1769 = vmatpush1.msra.mxu0 0.0
    %1770 = vmatprep.subr.mxu0 0.0
    %1771 = vmatpush1.msra.mxu0 0.0
    %1772 = vmatprep.subr.mxu0 0.0
    %1773 = vmatpush1.msra.mxu0 0.0
    %1774 = vmatprep.subr.mxu0 0.0
    %1775 = vmatpush1.msra.mxu0 0.0
    %1776 = vmatprep.subr.mxu0 0.0
    %1777 = vmatpush1.msra.mxu0 0.0
    %1778 = vmatprep.subr.mxu0 0.0
    %1779 = vmatpush1.msra.mxu0 0.0
    %1780 = vmatprep.subr.mxu0 0.0
    %1781 = vmatpush1.msra.mxu0 0.0
    %1782 = vmatprep.subr.mxu0 0.0
    %1783 = vmatpush1.msra.mxu0 0.0
    %1784 = vmatprep.subr.mxu0 0.0
    %1785 = vmatpush1.msra.mxu0 0.0
    %1786 = vmatprep.subr.mxu0 0.0
    %1787 = vmatpush1.msra.mxu0 0.0
    %1788 = vmatprep.subr.mxu0 0.0
    %1789 = vmatpush1.msra.mxu0 0.0
    %1790 = vmatprep.subr.mxu0 0.0
    %1791 = vmatpush1.msra.mxu0 0.0
    %1792 = vmatprep.subr.mxu0 0.0
    %1793 = vmatpush1.msra.mxu0 0.0
    %1794 = vmatprep.subr.mxu0 0.0
    %1795 = vmatpush1.msra.mxu0 0.0
    %1796 = vmatprep.mubr.f32.mxu0 0.0
    %1797 = vmatmul.mubr.f32.gmra.mrb[0].mxu0 %v1724
    %v1798 = vpop.f32.mrb[0].mxu0
    %v1799 = vadd.f32 0.0, %v1798
    %v1800 = vpop.f32.mrb[0].mxu0
    %v1801 = vadd.f32 0.0, %v1800
    %1802 = vdwg.mxu0
    %1803 = vmatprep.subr.mxu0 %v432
    %1804 = vmatpush1.msra.mxu0 %v431
    %1805 = vmatprep.subr.mxu0 %v436
    %1806 = vmatpush1.msra.mxu0 %v435
    %1807 = vmatprep.subr.mxu0 %v440
    %1808 = vmatpush1.msra.mxu0 %v439
    %1809 = vmatprep.subr.mxu0 %v444
    %1810 = vmatpush1.msra.mxu0 %v443
    %1811 = vmatprep.subr.mxu0 %v448
    %1812 = vmatpush1.msra.mxu0 %v447
    %1813 = vmatprep.subr.mxu0 %v452
    %1814 = vmatpush1.msra.mxu0 %v451
    %1815 = vmatprep.subr.mxu0 %v456
    %1816 = vmatpush1.msra.mxu0 %v455
    %1817 = vmatprep.subr.mxu0 %v460
    %1818 = vmatpush1.msra.mxu0 %v459
    %1819 = vmatprep.subr.mxu0 %v464
    %1820 = vmatpush1.msra.mxu0 %v463
    %1821 = vmatprep.subr.mxu0 %v468
    %1822 = vmatpush1.msra.mxu0 %v467
    %1823 = vmatprep.subr.mxu0 %v472
    %1824 = vmatpush1.msra.mxu0 %v471
    %1825 = vmatprep.subr.mxu0 %v476
    %1826 = vmatpush1.msra.mxu0 %v475
    %1827 = vmatprep.subr.mxu0 %v480
    %1828 = vmatpush1.msra.mxu0 %v479
    %1829 = vmatprep.subr.mxu0 %v484
    %1830 = vmatpush1.msra.mxu0 %v483
    %1831 = vmatprep.subr.mxu0 %v488
    %1832 = vmatpush1.msra.mxu0 %v487
    %1833 = vmatprep.subr.mxu0 %v492
    %1834 = vmatpush1.msra.mxu0 %v491
    %1835 = vmatprep.subr.mxu0 0.0
    %1836 = vmatpush1.msra.mxu0 0.0
    %1837 = vmatprep.subr.mxu0 0.0
    %1838 = vmatpush1.msra.mxu0 0.0
    %1839 = vmatprep.subr.mxu0 0.0
    %1840 = vmatpush1.msra.mxu0 0.0
    %1841 = vmatprep.subr.mxu0 0.0
    %1842 = vmatpush1.msra.mxu0 0.0
    %1843 = vmatprep.subr.mxu0 0.0
    %1844 = vmatpush1.msra.mxu0 0.0
    %1845 = vmatprep.subr.mxu0 0.0
    %1846 = vmatpush1.msra.mxu0 0.0
    %1847 = vmatprep.subr.mxu0 0.0
    %1848 = vmatpush1.msra.mxu0 0.0
    %1849 = vmatprep.subr.mxu0 0.0
    %1850 = vmatpush1.msra.mxu0 0.0
    %1851 = vmatprep.subr.mxu0 0.0
    %1852 = vmatpush1.msra.mxu0 0.0
    %1853 = vmatprep.subr.mxu0 0.0
    %1854 = vmatpush1.msra.mxu0 0.0
    %1855 = vmatprep.subr.mxu0 0.0
    %1856 = vmatpush1.msra.mxu0 0.0
    %1857 = vmatprep.subr.mxu0 0.0
    %1858 = vmatpush1.msra.mxu0 0.0
    %1859 = vmatprep.subr.mxu0 0.0
    %1860 = vmatpush1.msra.mxu0 0.0
    %1861 = vmatprep.subr.mxu0 0.0
    %1862 = vmatpush1.msra.mxu0 0.0
    %1863 = vmatprep.subr.mxu0 0.0
    %1864 = vmatpush1.msra.mxu0 0.0
    %1865 = vmatprep.subr.mxu0 0.0
    %1866 = vmatpush1.msra.mxu0 0.0
    %1867 = vmatprep.mubr.f32.mxu0 0.0
    %1868 = vmatmul.mubr.f32.gmra.mrb[0].mxu0 %v1724
    %v1869 = vpop.f32.mrb[0].mxu0
    %v1870 = vadd.f32 0.0, %v1869
    %v1871 = vpop.f32.mrb[0].mxu0
    %v1872 = vadd.f32 0.0, %v1871
    %1873 = vdwg.mxu0
    %v1874 = vadd.f32 %v1728, %v1799
    %v1875 = vadd.f32 %v1729, %v1801
    %v1876 = vadd.f32 %v1730, %v1870
    %v1877 = vadd.f32 %v1731, %v1872
    %v1878 = vxor.u32 %v1874, 2147483648
    %v1879 = vmul.f32 %v1878, 1.442695
    %v1880 = vpow.pop %v1879
    %v1881 = vadd.f32 %v1880, 1.0
    %v1882 = vrcp.pop %v1881
    %v1883 = vmul.f32 1.0, %v1882
    %v1884 = vxor.u32 %v1875, 2147483648
    %v1885 = vmul.f32 %v1884, 1.442695
    %v1886 = vpow.pop %v1885
    %v1887 = vadd.f32 %v1886, 1.0
    %v1888 = vrcp.pop %v1887
    %v1889 = vmul.f32 1.0, %v1888
    %v1890 = vtanh.pop %v1876
    %v1891 = vxor.u32 %v1877, 2147483648
    %v1892 = vmul.f32 %v1891, 1.442695
    %v1893 = vpow.pop %v1892
    %v1894 = vadd.f32 %v1893, 1.0
    %v1895 = vrcp.pop %v1894
    %v1896 = vmul.f32 1.0, %v1895
    %v1897 = vmul.f32 %v1889, %v1722
    %v1898 = vmul.f32 %v1883, %v1890
    %v1899 = vadd.f32 %v1897, %v1898
    %v1900 = vtanh.pop %v1899
    %v1901 = vmul.f32 %v1896, %v1900
    %1902 = vst [vmem:[#allocation3] sm:$0xff] %v1901
    %1903 = vst [vmem:[#allocation4] sm:$0xff] %v1899
    // Predicated region
    $region34: #{tpu_custom_call.1} parent=1 // pred_check
      %p1904 = pneg %p414
    $region35: #{tpu_custom_call.1} parent=1 // pred_check_branch
      %1906 = sbr.rel (%p1904) target = $region37
    $region36: #{tpu_custom_call.1} parent=1 // pred_region
      %1907 = vst [vmem:[#allocation11] sm:$0xff] %v1901
      %1908 = vst [vmem:[#allocation12] sm:$0xff] %v1899
    $region37: #{tpu_custom_call.1} parent=1 // pred_fallthru
      _
    // Predicated region
    $region38: #{tpu_custom_call.1} parent=1 // pred_check
      _
    $region39: #{tpu_custom_call.1} parent=1 // pred_check_branch
      %1910 = sbr.rel (0) target = $region41
    $region40: #{tpu_custom_call.1} parent=1 // pred_region
      %s1912 = ssub.s32 128, 128
      %1913 = vsyncadd [#allocation7], %s1912
      %s1915 = sshll.u32 [#allocation11], 4
      %s1916 = int_to_ptr.vmem [resolvable:$true] %s1915
      %1918 = dma.vmem_to_hbm [thread:$0]  %s1916, 128, %s4, [#allocation7]
    $region41: #{tpu_custom_call.1} parent=1 // pred_fallthru
      _
    // Predicated region
    $region42: #{tpu_custom_call.1} parent=1 // pred_check
      _
    $region43: #{tpu_custom_call.1} parent=1 // pred_check_branch
      %1920 = sbr.rel (0) target = $region45
    $region44: #{tpu_custom_call.1} parent=1 // pred_region
      %s1922 = ssub.s32 128, 128
      %1923 = vsyncadd [#allocation13], %s1922
      %s1925 = sshll.u32 [#allocation12], 4
      %s1926 = int_to_ptr.vmem [resolvable:$true] %s1925
      %1928 = dma.vmem_to_hbm [thread:$0]  %s1926, 128, %s5, [#allocation13]
    $region45: #{tpu_custom_call.1} parent=1 // pred_fallthru
      _
    // Predicated region
    $region46: #{tpu_custom_call.1} parent=1 // pred_check
      _
    $region47: #{tpu_custom_call.1} parent=1 // pred_check_branch
      %1930 = sbr.rel (0) target = $region49
    $region48: #{tpu_custom_call.1} parent=1 // pred_region
      %1931 = dma.done [#allocation7], 128
    $region49: #{tpu_custom_call.1} parent=1 // pred_fallthru
      _
    // Predicated region
    $region50: #{tpu_custom_call.1} parent=1 // pred_check
      _
    $region51: #{tpu_custom_call.1} parent=1 // pred_check_branch
      %1933 = sbr.rel (0) target = $region53
    $region52: #{tpu_custom_call.1} parent=1 // pred_region
      %1934 = dma.done [#allocation13], 128
    $region53: #{tpu_custom_call.1} parent=1 // pred_fallthru
      _
    %1935 = vsyncpa [#allocation6], 1
    %1936 = vsyncpa [#allocation9], 1
    %1937 = vsyncpa [#allocation7], 1
    %1938 = vsyncpa [#allocation13], 1

</llo_original>
